<compile_context>
chip_gen: v7x
topology: tpu7x:2x2x1
jax: 0.10.0
libtpu: 0.0.40
codegen_flags: <defaults>
</compile_context>

<pallas_src>
import functools

import jax
import jax.numpy as jnp
from jax.experimental import pallas as pl
from jax.experimental.pallas import tpu as pltpu


def _lstm_chunk_kernel(x_ref, wih_ref, whh_ref, b_ref, h0_ref, c0_ref,
                       y_ref, hn_ref, cn_ref,
                       gx_sc, h_sc, c_sc,
                       *, hidden_size, seq_len, time_chunk, unroll):
    """One grid step == one chunk of `time_chunk` timesteps of the LSTM."""
    H = hidden_size
    tc = time_chunk
    B = h0_ref.shape[0]
    chunk = pl.program_id(0)
    n_chunks = pl.num_programs(0)

    # Load the initial hidden/cell state into the VMEM scratch carried across
    # grid (chunk) iterations.
    @pl.when(chunk == 0)
    def _():
        h_sc[...] = h0_ref[...]
        c_sc[...] = c0_ref[...]

    # ---- Phase 1 (hoisted): batched input projection for the whole chunk. ----
    # x_ref is the chunk's (tc*B, I) time-major slab (rows ordered (t, b)); one
    # bf16 MXU matmul with f32 accumulation covers all tc timesteps, and the
    # fused PyTorch bias (b_ih + b_hh) is added once here, outside the loop.
    gx_sc[...] = (jnp.dot(x_ref[...], wih_ref[...],
                          preferred_element_type=jnp.float32)
                  + b_ref[...])

    # ---- Phase 2: sequential recurrence over the chunk (unrolled). -----------
    def step(j, carry):
        h_prev, c_prev = carry
        rec = jnp.dot(h_prev.astype(whh_ref.dtype), whh_ref[...],
                      preferred_element_type=jnp.float32)
        gates = gx_sc[pl.ds(j * B, B), :] + rec                  # (B, 4H) f32
        # Gate order [i, f, g, o]: sigmoid over the contiguous [i, f] span and
        # over [o], tanh over [g].
        if_act = jax.nn.sigmoid(gates[:, 0:2 * H])
        g_act = jnp.tanh(gates[:, 2 * H:3 * H])
        o_act = jax.nn.sigmoid(gates[:, 3 * H:4 * H])
        c_new = if_act[:, H:2 * H] * c_prev + if_act[:, 0:H] * g_act
        h_new = o_act * jnp.tanh(c_new)
        if seq_len % time_chunk != 0:
            # Padded tail steps (global t >= seq_len) must not advance state.
            valid = (chunk * tc + j) < seq_len
            h_new = jnp.where(valid, h_new, h_prev)
            c_new = jnp.where(valid, c_new, c_prev)
        y_ref[j] = h_new                                         # VMEM store
        return (h_new, c_new)

    h_fin, c_fin = jax.lax.fori_loop(0, tc, step, (h_sc[...], c_sc[...]),
                                     unroll=unroll)
    h_sc[...] = h_fin
    c_sc[...] = c_fin

    # Emit final hidden states on the last chunk.
    @pl.when(chunk == n_chunks - 1)
    def _():
        hn_ref[...] = h_fin
        cn_ref[...] = c_fin


@functools.partial(jax.jit, static_argnames=("compute_dtype", "time_chunk"))
def decoder_attn_forward(inputs, hidden_states, params, *,
                         compute_dtype=jnp.bfloat16, time_chunk=None):
    """Equivalent of DecoderAttn.forward with mlp_attn=None.

    inputs:        (B, T, I) float32
    hidden_states: tuple (h, c), each (1, B, H) float32
    params:        dict with w_ih (4H, I), w_hh (4H, H), b_ih (4H,), b_hh (4H,)
    returns:       (outputs (B, T, H), (h_n (1, B, H), c_n (1, B, H)))
    """
    h0, c0 = hidden_states
    B, T, I = inputs.shape
    H = h0.shape[-1]
    cdt = jnp.dtype(compute_dtype)

    tc = int(time_chunk) if time_chunk is not None else min(T, 128)
    n_chunks = -(-T // tc)
    t_pad = n_chunks * tc

    # Glue (plain JAX): pre-transpose weights for row-major MXU matmuls, fuse
    # the two PyTorch biases, go time-major and flatten x to a 2-D slab.
    wih_t = jnp.asarray(params["w_ih"]).astype(cdt).T            # (I, 4H)
    whh_t = jnp.asarray(params["w_hh"]).astype(cdt).T            # (H, 4H)
    bias = (jnp.asarray(params["b_ih"], jnp.float32)
            + jnp.asarray(params["b_hh"], jnp.float32)).reshape(1, 4 * H)

    x_tm = jnp.transpose(inputs, (1, 0, 2)).astype(cdt)          # (T, B, I)
    if t_pad != T:
        x_tm = jnp.pad(x_tm, ((0, t_pad - T), (0, 0), (0, 0)))
    x_flat = x_tm.reshape(t_pad * B, I)                          # rows = (t, b)

    h0_2d = h0[0].astype(jnp.float32)                            # (B, H)
    c0_2d = c0[0].astype(jnp.float32)

    kernel = functools.partial(_lstm_chunk_kernel, hidden_size=H, seq_len=T,
                               time_chunk=tc, unroll=min(tc, 8))

    grid_spec = pltpu.PrefetchScalarGridSpec(
        num_scalar_prefetch=0,
        grid=(n_chunks,),
        in_specs=[
            pl.BlockSpec((tc * B, I), lambda c: (c, 0)),         # x chunk slab
            pl.BlockSpec((I, 4 * H), lambda c: (0, 0)),          # W_ih^T
            pl.BlockSpec((H, 4 * H), lambda c: (0, 0)),          # W_hh^T
            pl.BlockSpec((1, 4 * H), lambda c: (0, 0)),          # fused bias
            pl.BlockSpec((B, H), lambda c: (0, 0)),              # h0
            pl.BlockSpec((B, H), lambda c: (0, 0)),              # c0
        ],
        out_specs=[
            pl.BlockSpec((tc, B, H), lambda c: (c, 0, 0)),       # y (time-major)
            pl.BlockSpec((B, H), lambda c: (0, 0)),              # h_n
            pl.BlockSpec((B, H), lambda c: (0, 0)),              # c_n
        ],
        scratch_shapes=[
            pltpu.VMEM((tc * B, 4 * H), jnp.float32),            # hoisted X@W_ih
            pltpu.VMEM((B, H), jnp.float32),                     # carried h
            pltpu.VMEM((B, H), jnp.float32),                     # carried c
        ],
    )

    # Rough VMEM budget (double-buffered ins/outs + weights + scratch); never
    # below the 32 MiB default, capped at v7x's 64 MiB physical VMEM.
    est = 2 * (tc * B * I * cdt.itemsize                         # x chunk
               + tc * B * H * 4                                  # y chunk
               + (I + H) * 4 * H * cdt.itemsize                  # weights
               + 4 * H * 4 + 4 * B * H * 4)                      # bias, h/c io
    est += tc * B * 4 * H * 4 + 2 * B * H * 4                    # scratch
    vmem_limit = int(min(64 * 1024 * 1024, max(32 * 1024 * 1024, 2 * est)))

    y_tm, h_n, c_n = pl.pallas_call(
        kernel,
        grid_spec=grid_spec,
        out_shape=(
            jax.ShapeDtypeStruct((t_pad, B, H), jnp.float32),
            jax.ShapeDtypeStruct((B, H), jnp.float32),
            jax.ShapeDtypeStruct((B, H), jnp.float32),
        ),
        compiler_params=pltpu.CompilerParams(
            dimension_semantics=("arbitrary",),   # sequential recurrence
            vmem_limit_bytes=vmem_limit,
        ),
    )(x_flat, wih_t, whh_t, bias, h0_2d, c0_2d)

    outputs = jnp.transpose(y_tm[:T], (1, 0, 2))                 # (B, T, H)
    return outputs, (h_n[None], c_n[None])


def _reference_lstm(inputs, hidden_states, params, compute_dtype=jnp.bfloat16):
    """Pure-JAX reference matching torch.nn.LSTM semantics (gate order i,f,g,o),
    using the same bf16-operand / f32-accumulate matmul recipe as the kernel."""
    h0, c0 = hidden_states
    H = h0.shape[-1]
    cdt = jnp.dtype(compute_dtype)
    wih_t = jnp.asarray(params["w_ih"]).astype(cdt).T
    whh_t = jnp.asarray(params["w_hh"]).astype(cdt).T
    b = (jnp.asarray(params["b_ih"], jnp.float32)
         + jnp.asarray(params["b_hh"], jnp.float32))
    x_tm = jnp.transpose(inputs, (1, 0, 2)).astype(cdt)

    def step(carry, x_t):
        h, c = carry
        gates = (jnp.dot(x_t, wih_t, preferred_element_type=jnp.float32)
                 + jnp.dot(h.astype(cdt), whh_t,
                           preferred_element_type=jnp.float32)
                 + b)
        i = jax.nn.sigmoid(gates[:, 0 * H:1 * H])
        f = jax.nn.sigmoid(gates[:, 1 * H:2 * H])
        g = jnp.tanh(gates[:, 2 * H:3 * H])
        o = jax.nn.sigmoid(gates[:, 3 * H:4 * H])
        c_new = f * c + i * g
        h_new = o * jnp.tanh(c_new)
        return (h_new, c_new), h_new

    (h_n, c_n), ys = jax.lax.scan(
        step, (h0[0].astype(jnp.float32), c0[0].astype(jnp.float32)), x_tm)
    return jnp.transpose(ys, (1, 0, 2)), (h_n[None], c_n[None])


if __name__ == "__main__":
    # Small shapes consistent with the module's forward contract
    # (batch_first LSTM: inputs (B, T, I), states (1, B, H)).
    B, T, I, H = 2, 8, 64, 32
    key = jax.random.PRNGKey(0)
    k_x, k_h, k_c, k_wih, k_whh, k_bih, k_bhh = jax.random.split(key, 7)

    # torch LSTM default init: U(-1/sqrt(H), 1/sqrt(H)).
    s = 1.0 / jnp.sqrt(jnp.float32(H))
    params = {
        "w_ih": jax.random.uniform(k_wih, (4 * H, I), jnp.float32, -s, s),
        "w_hh": jax.random.uniform(k_whh, (4 * H, H), jnp.float32, -s, s),
        "b_ih": jax.random.uniform(k_bih, (4 * H,), jnp.float32, -s, s),
        "b_hh": jax.random.uniform(k_bhh, (4 * H,), jnp.float32, -s, s),
    }

    inputs = jax.random.normal(k_x, (B, T, I), jnp.float32)
    h0 = jax.random.normal(k_h, (1, B, H), jnp.float32)
    c0 = jax.random.normal(k_c, (1, B, H), jnp.float32)

    outputs, (h_n, c_n) = decoder_attn_forward(inputs, (h0, c0), params)
    jax.block_until_ready((outputs, h_n, c_n))

    # Verify against a pure-JAX reference using the same bf16/f32 matmul recipe.
    ref_out, (ref_h, ref_c) = _reference_lstm(inputs, (h0, c0), params)
    assert outputs.shape == (B, T, H)
    assert h_n.shape == (1, B, H) and c_n.shape == (1, B, H)
    assert jnp.allclose(outputs, ref_out, atol=2e-3, rtol=2e-3)
    assert jnp.allclose(h_n, ref_h, atol=2e-3, rtol=2e-3)
    assert jnp.allclose(c_n, ref_c, atol=2e-3, rtol=2e-3)

    print("KERNEL_OK")
</pallas_src>

<mosaic_0001>
module attributes {stable_mosaic.version = 11 : i64} {
  func.func @_lstm_chunk_kernel(%arg0: i32, %arg1: memref<16x64xbf16, #tpu.memory_space<vmem>>, %arg2: memref<64x128xbf16, #tpu.memory_space<vmem>>, %arg3: memref<32x128xbf16, #tpu.memory_space<vmem>>, %arg4: memref<1x128xf32, #tpu.memory_space<vmem>>, %arg5: memref<2x32xf32, #tpu.memory_space<vmem>>, %arg6: memref<2x32xf32, #tpu.memory_space<vmem>>, %arg7: memref<8x2x32xf32, #tpu.memory_space<vmem>>, %arg8: memref<2x32xf32, #tpu.memory_space<vmem>>, %arg9: memref<2x32xf32, #tpu.memory_space<vmem>>, %arg10: memref<16x128xf32, #tpu.memory_space<vmem>>, %arg11: memref<2x32xf32, #tpu.memory_space<vmem>>, %arg12: memref<2x32xf32, #tpu.memory_space<vmem>>) attributes {dimension_semantics = [#tpu.dimension_semantics<arbitrary>], iteration_bounds = array<i64: 1>, scalar_prefetch = 0 : i64, scratch_operands = 3 : i64, tpu.core_type = #tpu.core_type<tc>, window_params = [{transform_indices = @transform_0, window_bounds = array<i64: 16, 64>}, {pipeline_mode = #tpu.pipeline_mode<synchronous>, transform_indices = @transform_1, window_bounds = array<i64: 64, 128>}, {pipeline_mode = #tpu.pipeline_mode<synchronous>, transform_indices = @transform_2, window_bounds = array<i64: 32, 128>}, {pipeline_mode = #tpu.pipeline_mode<synchronous>, transform_indices = @transform_3, window_bounds = array<i64: 1, 128>}, {pipeline_mode = #tpu.pipeline_mode<synchronous>, transform_indices = @transform_4, window_bounds = array<i64: 2, 32>}, {pipeline_mode = #tpu.pipeline_mode<synchronous>, transform_indices = @transform_5, window_bounds = array<i64: 2, 32>}, {transform_indices = @transform_6, window_bounds = array<i64: 8, 2, 32>}, {pipeline_mode = #tpu.pipeline_mode<synchronous>, transform_indices = @transform_7, window_bounds = array<i64: 2, 32>}, {pipeline_mode = #tpu.pipeline_mode<synchronous>, transform_indices = @transform_8, window_bounds = array<i64: 2, 32>}]} {
    %c0_i32 = arith.constant 0 : i32
    %0 = arith.cmpi eq, %arg0, %c0_i32 : i32
    %1 = arith.extui %0 : i1 to i32
    %c0_i32_0 = arith.constant 0 : i32
    %2 = arith.cmpi ne, %1, %c0_i32_0 : i32
    scf.if %2 {
      %c0_91 = arith.constant 0 : index
      %c0_92 = arith.constant 0 : index
      %273 = vector.load %arg5[%c0_91, %c0_92] : memref<2x32xf32, #tpu.memory_space<vmem>>, vector<2x32xf32>
      %c0_93 = arith.constant 0 : index
      %c0_94 = arith.constant 0 : index
      %274 = vector.load %arg11[%c0_93, %c0_94] : memref<2x32xf32, #tpu.memory_space<vmem>>, vector<2x32xf32>
      tpu.vector_store %arg11[%c0_93, %c0_94], %273 {strides = array<i32>} : memref<2x32xf32, #tpu.memory_space<vmem>>, vector<2x32xf32>,
      %c0_95 = arith.constant 0 : index
      %c0_96 = arith.constant 0 : index
      %275 = vector.load %arg6[%c0_95, %c0_96] : memref<2x32xf32, #tpu.memory_space<vmem>>, vector<2x32xf32>
      %c0_97 = arith.constant 0 : index
      %c0_98 = arith.constant 0 : index
      %276 = vector.load %arg12[%c0_97, %c0_98] : memref<2x32xf32, #tpu.memory_space<vmem>>, vector<2x32xf32>
      tpu.vector_store %arg12[%c0_97, %c0_98], %275 {strides = array<i32>} : memref<2x32xf32, #tpu.memory_space<vmem>>, vector<2x32xf32>,
    } else {
    }
    %c0 = arith.constant 0 : index
    %c0_1 = arith.constant 0 : index
    %3 = vector.load %arg1[%c0, %c0_1] : memref<16x64xbf16, #tpu.memory_space<vmem>>, vector<16x64xbf16>
    %c0_2 = arith.constant 0 : index
    %c0_3 = arith.constant 0 : index
    %4 = vector.load %arg2[%c0_2, %c0_3] : memref<64x128xbf16, #tpu.memory_space<vmem>>, vector<64x128xbf16>
    %cst = arith.constant dense<0.000000e+00> : vector<16x128xf32>
    %5 = tpu.matmul %3, %4, %cst {dimension_numbers = #tpu.dot_dimension_numbers<[1], [0], [0], [1], [0, 0, 1, 1], [], []>} : vector<16x64xbf16>, vector<64x128xbf16>, vector<16x128xf32> -> vector<16x128xf32>
    %c0_4 = arith.constant 0 : index
    %c0_5 = arith.constant 0 : index
    %6 = vector.load %arg4[%c0_4, %c0_5] : memref<1x128xf32, #tpu.memory_space<vmem>>, vector<1x128xf32>
    %7 = vector.broadcast %6 : vector<1x128xf32> to vector<16x128xf32>
    %8 = arith.addf %5, %7 : vector<16x128xf32>
    %c0_6 = arith.constant 0 : index
    %c0_7 = arith.constant 0 : index
    %9 = vector.load %arg10[%c0_6, %c0_7] : memref<16x128xf32, #tpu.memory_space<vmem>>, vector<16x128xf32>
    tpu.vector_store %arg10[%c0_6, %c0_7], %8 {strides = array<i32>} : memref<16x128xf32, #tpu.memory_space<vmem>>, vector<16x128xf32>,
    %c0_8 = arith.constant 0 : index
    %c0_9 = arith.constant 0 : index
    %10 = vector.load %arg11[%c0_8, %c0_9] : memref<2x32xf32, #tpu.memory_space<vmem>>, vector<2x32xf32>
    %c0_10 = arith.constant 0 : index
    %c0_11 = arith.constant 0 : index
    %11 = vector.load %arg12[%c0_10, %c0_11] : memref<2x32xf32, #tpu.memory_space<vmem>>, vector<2x32xf32>
    %c0_i32_12 = arith.constant 0 : i32
    %12 = arith.truncf %10 : vector<2x32xf32> to vector<2x32xbf16>
    %c0_13 = arith.constant 0 : index
    %c0_14 = arith.constant 0 : index
    %13 = vector.load %arg3[%c0_13, %c0_14] : memref<32x128xbf16, #tpu.memory_space<vmem>>, vector<32x128xbf16>
    %cst_15 = arith.constant dense<0.000000e+00> : vector<2x128xf32>
    %14 = tpu.matmul %12, %13, %cst_15 {dimension_numbers = #tpu.dot_dimension_numbers<[1], [0], [0], [1], [0, 0, 1, 1], [], []>} : vector<2x32xbf16>, vector<32x128xbf16>, vector<2x128xf32> -> vector<2x128xf32>
    %c2_i32 = arith.constant 2 : i32
    %15 = arith.muli %c0_i32_12, %c2_i32 : i32
    %16 = arith.index_cast %15 : i32 to index
    %c0_16 = arith.constant 0 : index
    %17 = vector.load %arg10[%16, %c0_16] : memref<16x128xf32, #tpu.memory_space<vmem>>, vector<2x128xf32>
    %18 = arith.addf %17, %14 : vector<2x128xf32>
    %19 = vector.extract_strided_slice %18 {offsets = [0, 0], sizes = [2, 64], strides = [1, 1]} : vector<2x128xf32> to vector<2x64xf32>
    %20 = arith.negf %19 : vector<2x64xf32>
    %21 = math.exp %20 : vector<2x64xf32>
    %cst_17 = arith.constant 1.000000e+00 : f32
    %22 = vector.broadcast %cst_17 : f32 to vector<2x64xf32>
    %23 = arith.addf %22, %21 : vector<2x64xf32>
    %24 = arith.divf %22, %23 : vector<2x64xf32>
    %25 = vector.extract_strided_slice %18 {offsets = [0, 64], sizes = [2, 32], strides = [1, 1]} : vector<2x128xf32> to vector<2x32xf32>
    %26 = math.tanh %25 : vector<2x32xf32>
    %27 = vector.extract_strided_slice %18 {offsets = [0, 96], sizes = [2, 32], strides = [1, 1]} : vector<2x128xf32> to vector<2x32xf32>
    %28 = arith.negf %27 : vector<2x32xf32>
    %29 = math.exp %28 : vector<2x32xf32>
    %cst_18 = arith.constant 1.000000e+00 : f32
    %30 = vector.broadcast %cst_18 : f32 to vector<2x32xf32>
    %31 = arith.addf %30, %29 : vector<2x32xf32>
    %32 = arith.divf %30, %31 : vector<2x32xf32>
    %33 = vector.extract_strided_slice %24 {offsets = [0, 32], sizes = [2, 32], strides = [1, 1]} : vector<2x64xf32> to vector<2x32xf32>
    %34 = arith.mulf %33, %11 : vector<2x32xf32>
    %35 = vector.extract_strided_slice %24 {offsets = [0, 0], sizes = [2, 32], strides = [1, 1]} : vector<2x64xf32> to vector<2x32xf32>
    %36 = arith.mulf %35, %26 : vector<2x32xf32>
    %37 = arith.addf %34, %36 : vector<2x32xf32>
    %38 = math.tanh %37 : vector<2x32xf32>
    %39 = arith.mulf %32, %38 : vector<2x32xf32>
    %40 = arith.index_cast %c0_i32_12 : i32 to index
    %c0_19 = arith.constant 0 : index
    %c0_20 = arith.constant 0 : index
    %41 = vector.load %arg7[%40, %c0_19, %c0_20] : memref<8x2x32xf32, #tpu.memory_space<vmem>>, vector<1x2x32xf32>
    %42 = vector.shape_cast %41 : vector<1x2x32xf32> to vector<2x32xf32>
    %43 = vector.shape_cast %39 : vector<2x32xf32> to vector<1x2x32xf32>
    tpu.vector_store %arg7[%40, %c0_19, %c0_20], %43 {strides = array<i32>} : memref<8x2x32xf32, #tpu.memory_space<vmem>>, vector<1x2x32xf32>,
    %c1_i32 = arith.constant 1 : i32
    %44 = arith.truncf %39 : vector<2x32xf32> to vector<2x32xbf16>
    %c0_21 = arith.constant 0 : index
    %c0_22 = arith.constant 0 : index
    %45 = vector.load %arg3[%c0_21, %c0_22] : memref<32x128xbf16, #tpu.memory_space<vmem>>, vector<32x128xbf16>
    %cst_23 = arith.constant dense<0.000000e+00> : vector<2x128xf32>
    %46 = tpu.matmul %44, %45, %cst_23 {dimension_numbers = #tpu.dot_dimension_numbers<[1], [0], [0], [1], [0, 0, 1, 1], [], []>} : vector<2x32xbf16>, vector<32x128xbf16>, vector<2x128xf32> -> vector<2x128xf32>
    %c2_i32_24 = arith.constant 2 : i32
    %47 = arith.muli %c1_i32, %c2_i32_24 : i32
    %48 = arith.index_cast %47 : i32 to index
    %c0_25 = arith.constant 0 : index
    %49 = vector.load %arg10[%48, %c0_25] : memref<16x128xf32, #tpu.memory_space<vmem>>, vector<2x128xf32>
    %50 = arith.addf %49, %46 : vector<2x128xf32>
    %51 = vector.extract_strided_slice %50 {offsets = [0, 0], sizes = [2, 64], strides = [1, 1]} : vector<2x128xf32> to vector<2x64xf32>
    %52 = arith.negf %51 : vector<2x64xf32>
    %53 = math.exp %52 : vector<2x64xf32>
    %cst_26 = arith.constant 1.000000e+00 : f32
    %54 = vector.broadcast %cst_26 : f32 to vector<2x64xf32>
    %55 = arith.addf %54, %53 : vector<2x64xf32>
    %56 = arith.divf %54, %55 : vector<2x64xf32>
    %57 = vector.extract_strided_slice %50 {offsets = [0, 64], sizes = [2, 32], strides = [1, 1]} : vector<2x128xf32> to vector<2x32xf32>
    %58 = math.tanh %57 : vector<2x32xf32>
    %59 = vector.extract_strided_slice %50 {offsets = [0, 96], sizes = [2, 32], strides = [1, 1]} : vector<2x128xf32> to vector<2x32xf32>
    %60 = arith.negf %59 : vector<2x32xf32>
    %61 = math.exp %60 : vector<2x32xf32>
    %cst_27 = arith.constant 1.000000e+00 : f32
    %62 = vector.broadcast %cst_27 : f32 to vector<2x32xf32>
    %63 = arith.addf %62, %61 : vector<2x32xf32>
    %64 = arith.divf %62, %63 : vector<2x32xf32>
    %65 = vector.extract_strided_slice %56 {offsets = [0, 32], sizes = [2, 32], strides = [1, 1]} : vector<2x64xf32> to vector<2x32xf32>
    %66 = arith.mulf %65, %37 : vector<2x32xf32>
    %67 = vector.extract_strided_slice %56 {offsets = [0, 0], sizes = [2, 32], strides = [1, 1]} : vector<2x64xf32> to vector<2x32xf32>
    %68 = arith.mulf %67, %58 : vector<2x32xf32>
    %69 = arith.addf %66, %68 : vector<2x32xf32>
    %70 = math.tanh %69 : vector<2x32xf32>
    %71 = arith.mulf %64, %70 : vector<2x32xf32>
    %72 = arith.index_cast %c1_i32 : i32 to index
    %c0_28 = arith.constant 0 : index
    %c0_29 = arith.constant 0 : index
    %73 = vector.load %arg7[%72, %c0_28, %c0_29] : memref<8x2x32xf32, #tpu.memory_space<vmem>>, vector<1x2x32xf32>
    %74 = vector.shape_cast %73 : vector<1x2x32xf32> to vector<2x32xf32>
    %75 = vector.shape_cast %71 : vector<2x32xf32> to vector<1x2x32xf32>
    tpu.vector_store %arg7[%72, %c0_28, %c0_29], %75 {strides = array<i32>} : memref<8x2x32xf32, #tpu.memory_space<vmem>>, vector<1x2x32xf32>,
    %c2_i32_30 = arith.constant 2 : i32
    %76 = arith.truncf %71 : vector<2x32xf32> to vector<2x32xbf16>
    %c0_31 = arith.constant 0 : index
    %c0_32 = arith.constant 0 : index
    %77 = vector.load %arg3[%c0_31, %c0_32] : memref<32x128xbf16, #tpu.memory_space<vmem>>, vector<32x128xbf16>
    %cst_33 = arith.constant dense<0.000000e+00> : vector<2x128xf32>
    %78 = tpu.matmul %76, %77, %cst_33 {dimension_numbers = #tpu.dot_dimension_numbers<[1], [0], [0], [1], [0, 0, 1, 1], [], []>} : vector<2x32xbf16>, vector<32x128xbf16>, vector<2x128xf32> -> vector<2x128xf32>
    %c2_i32_34 = arith.constant 2 : i32
    %79 = arith.muli %c2_i32_30, %c2_i32_34 : i32
    %80 = arith.index_cast %79 : i32 to index
    %c0_35 = arith.constant 0 : index
    %81 = vector.load %arg10[%80, %c0_35] : memref<16x128xf32, #tpu.memory_space<vmem>>, vector<2x128xf32>
    %82 = arith.addf %81, %78 : vector<2x128xf32>
    %83 = vector.extract_strided_slice %82 {offsets = [0, 0], sizes = [2, 64], strides = [1, 1]} : vector<2x128xf32> to vector<2x64xf32>
    %84 = arith.negf %83 : vector<2x64xf32>
    %85 = math.exp %84 : vector<2x64xf32>
    %cst_36 = arith.constant 1.000000e+00 : f32
    %86 = vector.broadcast %cst_36 : f32 to vector<2x64xf32>
    %87 = arith.addf %86, %85 : vector<2x64xf32>
    %88 = arith.divf %86, %87 : vector<2x64xf32>
    %89 = vector.extract_strided_slice %82 {offsets = [0, 64], sizes = [2, 32], strides = [1, 1]} : vector<2x128xf32> to vector<2x32xf32>
    %90 = math.tanh %89 : vector<2x32xf32>
    %91 = vector.extract_strided_slice %82 {offsets = [0, 96], sizes = [2, 32], strides = [1, 1]} : vector<2x128xf32> to vector<2x32xf32>
    %92 = arith.negf %91 : vector<2x32xf32>
    %93 = math.exp %92 : vector<2x32xf32>
    %cst_37 = arith.constant 1.000000e+00 : f32
    %94 = vector.broadcast %cst_37 : f32 to vector<2x32xf32>
    %95 = arith.addf %94, %93 : vector<2x32xf32>
    %96 = arith.divf %94, %95 : vector<2x32xf32>
    %97 = vector.extract_strided_slice %88 {offsets = [0, 32], sizes = [2, 32], strides = [1, 1]} : vector<2x64xf32> to vector<2x32xf32>
    %98 = arith.mulf %97, %69 : vector<2x32xf32>
    %99 = vector.extract_strided_slice %88 {offsets = [0, 0], sizes = [2, 32], strides = [1, 1]} : vector<2x64xf32> to vector<2x32xf32>
    %100 = arith.mulf %99, %90 : vector<2x32xf32>
    %101 = arith.addf %98, %100 : vector<2x32xf32>
    %102 = math.tanh %101 : vector<2x32xf32>
    %103 = arith.mulf %96, %102 : vector<2x32xf32>
    %104 = arith.index_cast %c2_i32_30 : i32 to index
    %c0_38 = arith.constant 0 : index
    %c0_39 = arith.constant 0 : index
    %105 = vector.load %arg7[%104, %c0_38, %c0_39] : memref<8x2x32xf32, #tpu.memory_space<vmem>>, vector<1x2x32xf32>
    %106 = vector.shape_cast %105 : vector<1x2x32xf32> to vector<2x32xf32>
    %107 = vector.shape_cast %103 : vector<2x32xf32> to vector<1x2x32xf32>
    tpu.vector_store %arg7[%104, %c0_38, %c0_39], %107 {strides = array<i32>} : memref<8x2x32xf32, #tpu.memory_space<vmem>>, vector<1x2x32xf32>,
    %c3_i32 = arith.constant 3 : i32
    %108 = arith.truncf %103 : vector<2x32xf32> to vector<2x32xbf16>
    %c0_40 = arith.constant 0 : index
    %c0_41 = arith.constant 0 : index
    %109 = vector.load %arg3[%c0_40, %c0_41] : memref<32x128xbf16, #tpu.memory_space<vmem>>, vector<32x128xbf16>
    %cst_42 = arith.constant dense<0.000000e+00> : vector<2x128xf32>
    %110 = tpu.matmul %108, %109, %cst_42 {dimension_numbers = #tpu.dot_dimension_numbers<[1], [0], [0], [1], [0, 0, 1, 1], [], []>} : vector<2x32xbf16>, vector<32x128xbf16>, vector<2x128xf32> -> vector<2x128xf32>
    %c2_i32_43 = arith.constant 2 : i32
    %111 = arith.muli %c3_i32, %c2_i32_43 : i32
    %112 = arith.index_cast %111 : i32 to index
    %c0_44 = arith.constant 0 : index
    %113 = vector.load %arg10[%112, %c0_44] : memref<16x128xf32, #tpu.memory_space<vmem>>, vector<2x128xf32>
    %114 = arith.addf %113, %110 : vector<2x128xf32>
    %115 = vector.extract_strided_slice %114 {offsets = [0, 0], sizes = [2, 64], strides = [1, 1]} : vector<2x128xf32> to vector<2x64xf32>
    %116 = arith.negf %115 : vector<2x64xf32>
    %117 = math.exp %116 : vector<2x64xf32>
    %cst_45 = arith.constant 1.000000e+00 : f32
    %118 = vector.broadcast %cst_45 : f32 to vector<2x64xf32>
    %119 = arith.addf %118, %117 : vector<2x64xf32>
    %120 = arith.divf %118, %119 : vector<2x64xf32>
    %121 = vector.extract_strided_slice %114 {offsets = [0, 64], sizes = [2, 32], strides = [1, 1]} : vector<2x128xf32> to vector<2x32xf32>
    %122 = math.tanh %121 : vector<2x32xf32>
    %123 = vector.extract_strided_slice %114 {offsets = [0, 96], sizes = [2, 32], strides = [1, 1]} : vector<2x128xf32> to vector<2x32xf32>
    %124 = arith.negf %123 : vector<2x32xf32>
    %125 = math.exp %124 : vector<2x32xf32>
    %cst_46 = arith.constant 1.000000e+00 : f32
    %126 = vector.broadcast %cst_46 : f32 to vector<2x32xf32>
    %127 = arith.addf %126, %125 : vector<2x32xf32>
    %128 = arith.divf %126, %127 : vector<2x32xf32>
    %129 = vector.extract_strided_slice %120 {offsets = [0, 32], sizes = [2, 32], strides = [1, 1]} : vector<2x64xf32> to vector<2x32xf32>
    %130 = arith.mulf %129, %101 : vector<2x32xf32>
    %131 = vector.extract_strided_slice %120 {offsets = [0, 0], sizes = [2, 32], strides = [1, 1]} : vector<2x64xf32> to vector<2x32xf32>
    %132 = arith.mulf %131, %122 : vector<2x32xf32>
    %133 = arith.addf %130, %132 : vector<2x32xf32>
    %134 = math.tanh %133 : vector<2x32xf32>
    %135 = arith.mulf %128, %134 : vector<2x32xf32>
    %136 = arith.index_cast %c3_i32 : i32 to index
    %c0_47 = arith.constant 0 : index
    %c0_48 = arith.constant 0 : index
    %137 = vector.load %arg7[%136, %c0_47, %c0_48] : memref<8x2x32xf32, #tpu.memory_space<vmem>>, vector<1x2x32xf32>
    %138 = vector.shape_cast %137 : vector<1x2x32xf32> to vector<2x32xf32>
    %139 = vector.shape_cast %135 : vector<2x32xf32> to vector<1x2x32xf32>
    tpu.vector_store %arg7[%136, %c0_47, %c0_48], %139 {strides = array<i32>} : memref<8x2x32xf32, #tpu.memory_space<vmem>>, vector<1x2x32xf32>,
    %c4_i32 = arith.constant 4 : i32
    %140 = arith.truncf %135 : vector<2x32xf32> to vector<2x32xbf16>
    %c0_49 = arith.constant 0 : index
    %c0_50 = arith.constant 0 : index
    %141 = vector.load %arg3[%c0_49, %c0_50] : memref<32x128xbf16, #tpu.memory_space<vmem>>, vector<32x128xbf16>
    %cst_51 = arith.constant dense<0.000000e+00> : vector<2x128xf32>
    %142 = tpu.matmul %140, %141, %cst_51 {dimension_numbers = #tpu.dot_dimension_numbers<[1], [0], [0], [1], [0, 0, 1, 1], [], []>} : vector<2x32xbf16>, vector<32x128xbf16>, vector<2x128xf32> -> vector<2x128xf32>
    %c2_i32_52 = arith.constant 2 : i32
    %143 = arith.muli %c4_i32, %c2_i32_52 : i32
    %144 = arith.index_cast %143 : i32 to index
    %c0_53 = arith.constant 0 : index
    %145 = vector.load %arg10[%144, %c0_53] : memref<16x128xf32, #tpu.memory_space<vmem>>, vector<2x128xf32>
    %146 = arith.addf %145, %142 : vector<2x128xf32>
    %147 = vector.extract_strided_slice %146 {offsets = [0, 0], sizes = [2, 64], strides = [1, 1]} : vector<2x128xf32> to vector<2x64xf32>
    %148 = arith.negf %147 : vector<2x64xf32>
    %149 = math.exp %148 : vector<2x64xf32>
    %cst_54 = arith.constant 1.000000e+00 : f32
    %150 = vector.broadcast %cst_54 : f32 to vector<2x64xf32>
    %151 = arith.addf %150, %149 : vector<2x64xf32>
    %152 = arith.divf %150, %151 : vector<2x64xf32>
    %153 = vector.extract_strided_slice %146 {offsets = [0, 64], sizes = [2, 32], strides = [1, 1]} : vector<2x128xf32> to vector<2x32xf32>
    %154 = math.tanh %153 : vector<2x32xf32>
    %155 = vector.extract_strided_slice %146 {offsets = [0, 96], sizes = [2, 32], strides = [1, 1]} : vector<2x128xf32> to vector<2x32xf32>
    %156 = arith.negf %155 : vector<2x32xf32>
    %157 = math.exp %156 : vector<2x32xf32>
    %cst_55 = arith.constant 1.000000e+00 : f32
    %158 = vector.broadcast %cst_55 : f32 to vector<2x32xf32>
    %159 = arith.addf %158, %157 : vector<2x32xf32>
    %160 = arith.divf %158, %159 : vector<2x32xf32>
    %161 = vector.extract_strided_slice %152 {offsets = [0, 32], sizes = [2, 32], strides = [1, 1]} : vector<2x64xf32> to vector<2x32xf32>
    %162 = arith.mulf %161, %133 : vector<2x32xf32>
    %163 = vector.extract_strided_slice %152 {offsets = [0, 0], sizes = [2, 32], strides = [1, 1]} : vector<2x64xf32> to vector<2x32xf32>
    %164 = arith.mulf %163, %154 : vector<2x32xf32>
    %165 = arith.addf %162, %164 : vector<2x32xf32>
    %166 = math.tanh %165 : vector<2x32xf32>
    %167 = arith.mulf %160, %166 : vector<2x32xf32>
    %168 = arith.index_cast %c4_i32 : i32 to index
    %c0_56 = arith.constant 0 : index
    %c0_57 = arith.constant 0 : index
    %169 = vector.load %arg7[%168, %c0_56, %c0_57] : memref<8x2x32xf32, #tpu.memory_space<vmem>>, vector<1x2x32xf32>
    %170 = vector.shape_cast %169 : vector<1x2x32xf32> to vector<2x32xf32>
    %171 = vector.shape_cast %167 : vector<2x32xf32> to vector<1x2x32xf32>
    tpu.vector_store %arg7[%168, %c0_56, %c0_57], %171 {strides = array<i32>} : memref<8x2x32xf32, #tpu.memory_space<vmem>>, vector<1x2x32xf32>,
    %c5_i32 = arith.constant 5 : i32
    %172 = arith.truncf %167 : vector<2x32xf32> to vector<2x32xbf16>
    %c0_58 = arith.constant 0 : index
    %c0_59 = arith.constant 0 : index
    %173 = vector.load %arg3[%c0_58, %c0_59] : memref<32x128xbf16, #tpu.memory_space<vmem>>, vector<32x128xbf16>
    %cst_60 = arith.constant dense<0.000000e+00> : vector<2x128xf32>
    %174 = tpu.matmul %172, %173, %cst_60 {dimension_numbers = #tpu.dot_dimension_numbers<[1], [0], [0], [1], [0, 0, 1, 1], [], []>} : vector<2x32xbf16>, vector<32x128xbf16>, vector<2x128xf32> -> vector<2x128xf32>
    %c2_i32_61 = arith.constant 2 : i32
    %175 = arith.muli %c5_i32, %c2_i32_61 : i32
    %176 = arith.index_cast %175 : i32 to index
    %c0_62 = arith.constant 0 : index
    %177 = vector.load %arg10[%176, %c0_62] : memref<16x128xf32, #tpu.memory_space<vmem>>, vector<2x128xf32>
    %178 = arith.addf %177, %174 : vector<2x128xf32>
    %179 = vector.extract_strided_slice %178 {offsets = [0, 0], sizes = [2, 64], strides = [1, 1]} : vector<2x128xf32> to vector<2x64xf32>
    %180 = arith.negf %179 : vector<2x64xf32>
    %181 = math.exp %180 : vector<2x64xf32>
    %cst_63 = arith.constant 1.000000e+00 : f32
    %182 = vector.broadcast %cst_63 : f32 to vector<2x64xf32>
    %183 = arith.addf %182, %181 : vector<2x64xf32>
    %184 = arith.divf %182, %183 : vector<2x64xf32>
    %185 = vector.extract_strided_slice %178 {offsets = [0, 64], sizes = [2, 32], strides = [1, 1]} : vector<2x128xf32> to vector<2x32xf32>
    %186 = math.tanh %185 : vector<2x32xf32>
    %187 = vector.extract_strided_slice %178 {offsets = [0, 96], sizes = [2, 32], strides = [1, 1]} : vector<2x128xf32> to vector<2x32xf32>
    %188 = arith.negf %187 : vector<2x32xf32>
    %189 = math.exp %188 : vector<2x32xf32>
    %cst_64 = arith.constant 1.000000e+00 : f32
    %190 = vector.broadcast %cst_64 : f32 to vector<2x32xf32>
    %191 = arith.addf %190, %189 : vector<2x32xf32>
    %192 = arith.divf %190, %191 : vector<2x32xf32>
    %193 = vector.extract_strided_slice %184 {offsets = [0, 32], sizes = [2, 32], strides = [1, 1]} : vector<2x64xf32> to vector<2x32xf32>
    %194 = arith.mulf %193, %165 : vector<2x32xf32>
    %195 = vector.extract_strided_slice %184 {offsets = [0, 0], sizes = [2, 32], strides = [1, 1]} : vector<2x64xf32> to vector<2x32xf32>
    %196 = arith.mulf %195, %186 : vector<2x32xf32>
    %197 = arith.addf %194, %196 : vector<2x32xf32>
    %198 = math.tanh %197 : vector<2x32xf32>
    %199 = arith.mulf %192, %198 : vector<2x32xf32>
    %200 = arith.index_cast %c5_i32 : i32 to index
    %c0_65 = arith.constant 0 : index
    %c0_66 = arith.constant 0 : index
    %201 = vector.load %arg7[%200, %c0_65, %c0_66] : memref<8x2x32xf32, #tpu.memory_space<vmem>>, vector<1x2x32xf32>
    %202 = vector.shape_cast %201 : vector<1x2x32xf32> to vector<2x32xf32>
    %203 = vector.shape_cast %199 : vector<2x32xf32> to vector<1x2x32xf32>
    tpu.vector_store %arg7[%200, %c0_65, %c0_66], %203 {strides = array<i32>} : memref<8x2x32xf32, #tpu.memory_space<vmem>>, vector<1x2x32xf32>,
    %c6_i32 = arith.constant 6 : i32
    %204 = arith.truncf %199 : vector<2x32xf32> to vector<2x32xbf16>
    %c0_67 = arith.constant 0 : index
    %c0_68 = arith.constant 0 : index
    %205 = vector.load %arg3[%c0_67, %c0_68] : memref<32x128xbf16, #tpu.memory_space<vmem>>, vector<32x128xbf16>
    %cst_69 = arith.constant dense<0.000000e+00> : vector<2x128xf32>
    %206 = tpu.matmul %204, %205, %cst_69 {dimension_numbers = #tpu.dot_dimension_numbers<[1], [0], [0], [1], [0, 0, 1, 1], [], []>} : vector<2x32xbf16>, vector<32x128xbf16>, vector<2x128xf32> -> vector<2x128xf32>
    %c2_i32_70 = arith.constant 2 : i32
    %207 = arith.muli %c6_i32, %c2_i32_70 : i32
    %208 = arith.index_cast %207 : i32 to index
    %c0_71 = arith.constant 0 : index
    %209 = vector.load %arg10[%208, %c0_71] : memref<16x128xf32, #tpu.memory_space<vmem>>, vector<2x128xf32>
    %210 = arith.addf %209, %206 : vector<2x128xf32>
    %211 = vector.extract_strided_slice %210 {offsets = [0, 0], sizes = [2, 64], strides = [1, 1]} : vector<2x128xf32> to vector<2x64xf32>
    %212 = arith.negf %211 : vector<2x64xf32>
    %213 = math.exp %212 : vector<2x64xf32>
    %cst_72 = arith.constant 1.000000e+00 : f32
    %214 = vector.broadcast %cst_72 : f32 to vector<2x64xf32>
    %215 = arith.addf %214, %213 : vector<2x64xf32>
    %216 = arith.divf %214, %215 : vector<2x64xf32>
    %217 = vector.extract_strided_slice %210 {offsets = [0, 64], sizes = [2, 32], strides = [1, 1]} : vector<2x128xf32> to vector<2x32xf32>
    %218 = math.tanh %217 : vector<2x32xf32>
    %219 = vector.extract_strided_slice %210 {offsets = [0, 96], sizes = [2, 32], strides = [1, 1]} : vector<2x128xf32> to vector<2x32xf32>
    %220 = arith.negf %219 : vector<2x32xf32>
    %221 = math.exp %220 : vector<2x32xf32>
    %cst_73 = arith.constant 1.000000e+00 : f32
    %222 = vector.broadcast %cst_73 : f32 to vector<2x32xf32>
    %223 = arith.addf %222, %221 : vector<2x32xf32>
    %224 = arith.divf %222, %223 : vector<2x32xf32>
    %225 = vector.extract_strided_slice %216 {offsets = [0, 32], sizes = [2, 32], strides = [1, 1]} : vector<2x64xf32> to vector<2x32xf32>
    %226 = arith.mulf %225, %197 : vector<2x32xf32>
    %227 = vector.extract_strided_slice %216 {offsets = [0, 0], sizes = [2, 32], strides = [1, 1]} : vector<2x64xf32> to vector<2x32xf32>
    %228 = arith.mulf %227, %218 : vector<2x32xf32>
    %229 = arith.addf %226, %228 : vector<2x32xf32>
    %230 = math.tanh %229 : vector<2x32xf32>
    %231 = arith.mulf %224, %230 : vector<2x32xf32>
    %232 = arith.index_cast %c6_i32 : i32 to index
    %c0_74 = arith.constant 0 : index
    %c0_75 = arith.constant 0 : index
    %233 = vector.load %arg7[%232, %c0_74, %c0_75] : memref<8x2x32xf32, #tpu.memory_space<vmem>>, vector<1x2x32xf32>
    %234 = vector.shape_cast %233 : vector<1x2x32xf32> to vector<2x32xf32>
    %235 = vector.shape_cast %231 : vector<2x32xf32> to vector<1x2x32xf32>
    tpu.vector_store %arg7[%232, %c0_74, %c0_75], %235 {strides = array<i32>} : memref<8x2x32xf32, #tpu.memory_space<vmem>>, vector<1x2x32xf32>,
    %c7_i32 = arith.constant 7 : i32
    %236 = arith.truncf %231 : vector<2x32xf32> to vector<2x32xbf16>
    %c0_76 = arith.constant 0 : index
    %c0_77 = arith.constant 0 : index
    %237 = vector.load %arg3[%c0_76, %c0_77] : memref<32x128xbf16, #tpu.memory_space<vmem>>, vector<32x128xbf16>
    %cst_78 = arith.constant dense<0.000000e+00> : vector<2x128xf32>
    %238 = tpu.matmul %236, %237, %cst_78 {dimension_numbers = #tpu.dot_dimension_numbers<[1], [0], [0], [1], [0, 0, 1, 1], [], []>} : vector<2x32xbf16>, vector<32x128xbf16>, vector<2x128xf32> -> vector<2x128xf32>
    %c2_i32_79 = arith.constant 2 : i32
    %239 = arith.muli %c7_i32, %c2_i32_79 : i32
    %240 = arith.index_cast %239 : i32 to index
    %c0_80 = arith.constant 0 : index
    %241 = vector.load %arg10[%240, %c0_80] : memref<16x128xf32, #tpu.memory_space<vmem>>, vector<2x128xf32>
    %242 = arith.addf %241, %238 : vector<2x128xf32>
    %243 = vector.extract_strided_slice %242 {offsets = [0, 0], sizes = [2, 64], strides = [1, 1]} : vector<2x128xf32> to vector<2x64xf32>
    %244 = arith.negf %243 : vector<2x64xf32>
    %245 = math.exp %244 : vector<2x64xf32>
    %cst_81 = arith.constant 1.000000e+00 : f32
    %246 = vector.broadcast %cst_81 : f32 to vector<2x64xf32>
    %247 = arith.addf %246, %245 : vector<2x64xf32>
    %248 = arith.divf %246, %247 : vector<2x64xf32>
    %249 = vector.extract_strided_slice %242 {offsets = [0, 64], sizes = [2, 32], strides = [1, 1]} : vector<2x128xf32> to vector<2x32xf32>
    %250 = math.tanh %249 : vector<2x32xf32>
    %251 = vector.extract_strided_slice %242 {offsets = [0, 96], sizes = [2, 32], strides = [1, 1]} : vector<2x128xf32> to vector<2x32xf32>
    %252 = arith.negf %251 : vector<2x32xf32>
    %253 = math.exp %252 : vector<2x32xf32>
    %cst_82 = arith.constant 1.000000e+00 : f32
    %254 = vector.broadcast %cst_82 : f32 to vector<2x32xf32>
    %255 = arith.addf %254, %253 : vector<2x32xf32>
    %256 = arith.divf %254, %255 : vector<2x32xf32>
    %257 = vector.extract_strided_slice %248 {offsets = [0, 32], sizes = [2, 32], strides = [1, 1]} : vector<2x64xf32> to vector<2x32xf32>
    %258 = arith.mulf %257, %229 : vector<2x32xf32>
    %259 = vector.extract_strided_slice %248 {offsets = [0, 0], sizes = [2, 32], strides = [1, 1]} : vector<2x64xf32> to vector<2x32xf32>
    %260 = arith.mulf %259, %250 : vector<2x32xf32>
    %261 = arith.addf %258, %260 : vector<2x32xf32>
    %262 = math.tanh %261 : vector<2x32xf32>
    %263 = arith.mulf %256, %262 : vector<2x32xf32>
    %264 = arith.index_cast %c7_i32 : i32 to index
    %c0_83 = arith.constant 0 : index
    %c0_84 = arith.constant 0 : index
    %265 = vector.load %arg7[%264, %c0_83, %c0_84] : memref<8x2x32xf32, #tpu.memory_space<vmem>>, vector<1x2x32xf32>
    %266 = vector.shape_cast %265 : vector<1x2x32xf32> to vector<2x32xf32>
    %267 = vector.shape_cast %263 : vector<2x32xf32> to vector<1x2x32xf32>
    tpu.vector_store %arg7[%264, %c0_83, %c0_84], %267 {strides = array<i32>} : memref<8x2x32xf32, #tpu.memory_space<vmem>>, vector<1x2x32xf32>,
    %c8_i32 = arith.constant 8 : i32
    %c0_85 = arith.constant 0 : index
    %c0_86 = arith.constant 0 : index
    %268 = vector.load %arg11[%c0_85, %c0_86] : memref<2x32xf32, #tpu.memory_space<vmem>>, vector<2x32xf32>
    tpu.vector_store %arg11[%c0_85, %c0_86], %263 {strides = array<i32>} : memref<2x32xf32, #tpu.memory_space<vmem>>, vector<2x32xf32>,
    %c0_87 = arith.constant 0 : index
    %c0_88 = arith.constant 0 : index
    %269 = vector.load %arg12[%c0_87, %c0_88] : memref<2x32xf32, #tpu.memory_space<vmem>>, vector<2x32xf32>
    tpu.vector_store %arg12[%c0_87, %c0_88], %261 {strides = array<i32>} : memref<2x32xf32, #tpu.memory_space<vmem>>, vector<2x32xf32>,
    %c0_i32_89 = arith.constant 0 : i32
    %270 = arith.cmpi eq, %arg0, %c0_i32_89 : i32
    %271 = arith.extui %270 : i1 to i32
    %c0_i32_90 = arith.constant 0 : i32
    %272 = arith.cmpi ne, %271, %c0_i32_90 : i32
    scf.if %272 {
      %c0_91 = arith.constant 0 : index
      %c0_92 = arith.constant 0 : index
      %273 = vector.load %arg8[%c0_91, %c0_92] : memref<2x32xf32, #tpu.memory_space<vmem>>, vector<2x32xf32>
      tpu.vector_store %arg8[%c0_91, %c0_92], %263 {strides = array<i32>} : memref<2x32xf32, #tpu.memory_space<vmem>>, vector<2x32xf32>,
      %c0_93 = arith.constant 0 : index
      %c0_94 = arith.constant 0 : index
      %274 = vector.load %arg9[%c0_93, %c0_94] : memref<2x32xf32, #tpu.memory_space<vmem>>, vector<2x32xf32>
      tpu.vector_store %arg9[%c0_93, %c0_94], %261 {strides = array<i32>} : memref<2x32xf32, #tpu.memory_space<vmem>>, vector<2x32xf32>,
    } else {
    }
    return
  }
  func.func @transform_0(%arg0: i32) -> (i32, i32) {
    %c0_i32 = arith.constant 0 : i32
    %c0_i32_0 = arith.constant 0 : i32
    return %arg0, %c0_i32 : i32, i32
  }
  func.func @transform_1(%arg0: i32) -> (i32, i32) {
    %c0_i32 = arith.constant 0 : i32
    %c0_i32_0 = arith.constant 0 : i32
    %c0_i32_1 = arith.constant 0 : i32
    return %c0_i32, %c0_i32_0 : i32, i32
  }
  func.func @transform_2(%arg0: i32) -> (i32, i32) {
    %c0_i32 = arith.constant 0 : i32
    %c0_i32_0 = arith.constant 0 : i32
    %c0_i32_1 = arith.constant 0 : i32
    return %c0_i32, %c0_i32_0 : i32, i32
  }
  func.func @transform_3(%arg0: i32) -> (i32, i32) {
    %c0_i32 = arith.constant 0 : i32
    %c0_i32_0 = arith.constant 0 : i32
    %c0_i32_1 = arith.constant 0 : i32
    return %c0_i32, %c0_i32_0 : i32, i32
  }
  func.func @transform_4(%arg0: i32) -> (i32, i32) {
    %c0_i32 = arith.constant 0 : i32
    %c0_i32_0 = arith.constant 0 : i32
    %c0_i32_1 = arith.constant 0 : i32
    return %c0_i32, %c0_i32_0 : i32, i32
  }
  func.func @transform_5(%arg0: i32) -> (i32, i32) {
    %c0_i32 = arith.constant 0 : i32
    %c0_i32_0 = arith.constant 0 : i32
    %c0_i32_1 = arith.constant 0 : i32
    return %c0_i32, %c0_i32_0 : i32, i32
  }
  func.func @transform_6(%arg0: i32) -> (i32, i32, i32) {
    %c0_i32 = arith.constant 0 : i32
    %c0_i32_0 = arith.constant 0 : i32
    %c0_i32_1 = arith.constant 0 : i32
    return %arg0, %c0_i32, %c0_i32_0 : i32, i32, i32
  }
  func.func @transform_7(%arg0: i32) -> (i32, i32) {
    %c0_i32 = arith.constant 0 : i32
    %c0_i32_0 = arith.constant 0 : i32
    %c0_i32_1 = arith.constant 0 : i32
    return %c0_i32, %c0_i32_0 : i32, i32
  }
  func.func @transform_8(%arg0: i32) -> (i32, i32) {
    %c0_i32 = arith.constant 0 : i32
    %c0_i32_0 = arith.constant 0 : i32
    %c0_i32_1 = arith.constant 0 : i32
    return %c0_i32, %c0_i32_0 : i32, i32
  }
}

</mosaic_0001>

<llo_original>
// kernel: decoder_attn_forward.1
$region0: #{decoder_attn_forward.1}
  #allocation0 [shape = 'u32[]', space=smem, size = 0x4, offset = 0x4, fixed_abs, tag = 'smem constant byte address 0x4 - core index']
  #allocation1 [shape = 'u32[144,128]{1,0:T(1,128)}', space=vmem, size = 0x12000, scoped, tag = 'internal scratch']
  #allocation2 [shape = 'f32[16,128]{1,0:T(8,128)}', space=vmem, size = 0x2000, scoped, tag = 'scratch operand']
  #allocation3 [shape = 'f32[2,32]{1,0:T(2,128)}', space=vmem, size = 0x400, scoped, tag = 'scratch operand']
  #allocation4 [shape = 'f32[2,32]{1,0:T(2,128)}', space=vmem, size = 0x400, scoped, tag = 'scratch operand']
  %s0 = inlined_call_operand.vmem [shape: bf16[16,64], index: 0, kind: input, shape index: {}]
  %s1 = inlined_call_operand.vmem [shape: bf16[64,128], index: 1, kind: input, shape index: {}]
  %s2 = inlined_call_operand.vmem [shape: bf16[32,128], index: 2, kind: input, shape index: {}]
  %s3 = inlined_call_operand.vmem [shape: f32[1,128], index: 3, kind: input, shape index: {}]
  %s4 = inlined_call_operand.vmem [shape: f32[2,32], index: 4, kind: input, shape index: {}]
  %s5 = inlined_call_operand.vmem [shape: f32[2,32], index: 5, kind: input, shape index: {}]
  %s6 = inlined_call_operand.vmem [shape: f32[8,2,32], index: 6, kind: output, shape index: {0}]
  %s7 = inlined_call_operand.hbm [shape: f32[2,32], index: 7, kind: output, shape index: {1}]
  %s8 = inlined_call_operand.hbm [shape: f32[2,32], index: 8, kind: output, shape index: {2}]
  %9 = xla_tuple %s6, %s7, %s8
  %s10 = sld [smem:[#allocation0]]
  $region58: #{decoder_attn_forward.1} parent=0
    _
  %s12 = ssub.s32 1, %s10
  %s13 = scalar_select 0, %s12, %s10
  $region1: #{decoder_attn_forward.1} parent=0
    #allocation5 [shape = 'u8[1024]{0}', space=vmem, size = 0x400, scoped, tag = 'output window, operand 1, single buffered']
    #allocation6 [shape = 's32[1]{0}', space=sflag, size = 0x4, scoped, tag = 'scoped memory for decoder_attn_forward.1']
    #allocation7 [shape = 'u8[1024]{0}', space=vmem, size = 0x400, scoped, tag = 'output window, operand 2, single buffered']
    #allocation8 [shape = 's32[1]{0}', space=sflag, size = 0x4, scoped, tag = 'scoped memory for decoder_attn_forward.1']
    %14 = vsyncpa [#allocation6], 0
    %15 = vsyncpa [#allocation8], 0
    // Predicated region
    $region2: #{decoder_attn_forward.1} parent=1 // pred_check
      _
    $region3: #{decoder_attn_forward.1} parent=1 // pred_check_branch
      %17 = sbr.rel (0) target = $region5
    $region4: #{decoder_attn_forward.1} parent=1 // pred_region
      _
    $region5: #{decoder_attn_forward.1} parent=1 // pred_fallthru
      _
    // Predicated region
    $region6: #{decoder_attn_forward.1} parent=1 // pred_check
      _
    $region7: #{decoder_attn_forward.1} parent=1 // pred_check_branch
      %19 = sbr.rel (0) target = $region9
    $region8: #{decoder_attn_forward.1} parent=1 // pred_region
      _
    $region9: #{decoder_attn_forward.1} parent=1 // pred_fallthru
      _
    // Predicated region
    $region10: #{decoder_attn_forward.1} parent=1 // pred_check
      _
    $region11: #{decoder_attn_forward.1} parent=1 // pred_check_branch
      %21 = sbr.rel (0) target = $region13
    $region12: #{decoder_attn_forward.1} parent=1 // pred_region
      _
    $region13: #{decoder_attn_forward.1} parent=1 // pred_fallthru
      _
    // Predicated region
    $region14: #{decoder_attn_forward.1} parent=1 // pred_check
      _
    $region15: #{decoder_attn_forward.1} parent=1 // pred_check_branch
      %23 = sbr.rel (0) target = $region17
    $region16: #{decoder_attn_forward.1} parent=1 // pred_region
      _
    $region17: #{decoder_attn_forward.1} parent=1 // pred_fallthru
      _
    // Predicated region
    $region18: #{decoder_attn_forward.1} parent=1 // pred_check
      _
    $region19: #{decoder_attn_forward.1} parent=1 // pred_check_branch
      %25 = sbr.rel (0) target = $region21
    $region20: #{decoder_attn_forward.1} parent=1 // pred_region
      _
    $region21: #{decoder_attn_forward.1} parent=1 // pred_fallthru
      _
    // Predicated region
    $region22: #{decoder_attn_forward.1} parent=1 // pred_check
      _
    $region23: #{decoder_attn_forward.1} parent=1 // pred_check_branch
      %27 = sbr.rel (0) target = $region25
    $region24: #{decoder_attn_forward.1} parent=1 // pred_region
      _
    $region25: #{decoder_attn_forward.1} parent=1 // pred_fallthru
      _
    %p29 = scmp.eq.s32.totalorder 0, 0
    // Predicated region
    $region26: #{decoder_attn_forward.1} parent=1 // pred_check
      %p30 = pneg %p29
    $region27: #{decoder_attn_forward.1} parent=1 // pred_check_branch
      %32 = sbr.rel (%p30) target = $region29
    $region28: #{decoder_attn_forward.1} parent=1 // pred_region
      %v33 = vld [vmem:[%s4] sm:$0x3]
      %vm34 = vcmask 254976
      %35 = vst.msk [vmem:[#allocation3] sm:$0x3] %vm34, %v33
      %v36 = vld [vmem:[%s5] sm:$0x3]
      %37 = vst.msk [vmem:[#allocation4] sm:$0x3] %vm34, %v36
    $region29: #{decoder_attn_forward.1} parent=1 // pred_fallthru
      _
    %v38 = vld [vmem:[%s0] sm:$0xf]
    %v39 = vld [vmem:[%s0 + $0x4] sm:$0xf]
    %v40 = vld [vmem:[%s1] sm:$0xf]
    %v41 = vld [vmem:[%s1 + $0x4] sm:$0xf]
    %v42 = vld [vmem:[%s1 + $0x8] sm:$0xf]
    %v43 = vld [vmem:[%s1 + $0xc] sm:$0xf]
    %v44 = vld [vmem:[%s1 + $0x10] sm:$0xf]
    %v45 = vld [vmem:[%s1 + $0x14] sm:$0xf]
    %v46 = vld [vmem:[%s1 + $0x18] sm:$0xf]
    %v47 = vld [vmem:[%s1 + $0x1c] sm:$0xf]
    %v48 = vld [vmem:[%s3] sm:$0x1]
    %v50 = vlaneseq
    %v51 = vshrl.u32 %v50, 7
    %v52 = vsub.s32 0, %v51
    %v53 = vrot.slane %v48, %v52
    %v57 = vunpack.c.l.b16 %v38
    %v58 = vunpack.c.l.b16 %v39
    %v59 = vpack.c.b16 %v58, %v57
    %v68 = vunpack.c.l.b16 %v40
    %v69 = vunpack.c.l.b16 %v41
    %v70 = vunpack.c.l.b16 %v42
    %v71 = vunpack.c.l.b16 %v43
    %v72 = vunpack.c.l.b16 %v44
    %v73 = vunpack.c.l.b16 %v45
    %v74 = vunpack.c.l.b16 %v46
    %v75 = vunpack.c.l.b16 %v47
    %v76 = vpack.c.b16 %v69, %v68
    %v77 = vpack.c.b16 %v71, %v70
    %v78 = vpack.c.b16 %v73, %v72
    %v79 = vpack.c.b16 %v75, %v74
    %vm84 = vcmask 523264
    %v86 = vsel %vm84, %v59, 0
    %88 = vmatprep.subr.bf16.mxu0 0
    %89 = vmatpush1.bf16.msra.mxu0 %v76
    %90 = vmatprep.subr.bf16.mxu0 0
    %91 = vmatpush1.bf16.msra.mxu0 %v77
    %92 = vmatprep.subr.bf16.mxu0 0
    %93 = vmatpush1.bf16.msra.mxu0 %v78
    %94 = vmatprep.subr.bf16.mxu0 0
    %95 = vmatpush1.bf16.msra.mxu0 %v79
    %96 = vmatprep.subr.bf16.mxu0 0
    %97 = vmatpush1.bf16.msra.mxu0 0
    %98 = vmatprep.subr.bf16.mxu0 0
    %99 = vmatpush1.bf16.msra.mxu0 0
    %100 = vmatprep.subr.bf16.mxu0 0
    %101 = vmatpush1.bf16.msra.mxu0 0
    %102 = vmatprep.subr.bf16.mxu0 0
    %103 = vmatpush1.bf16.msra.mxu0 0
    %104 = vmatprep.subr.bf16.mxu0 0
    %105 = vmatpush1.bf16.msra.mxu0 0
    %106 = vmatprep.subr.bf16.mxu0 0
    %107 = vmatpush1.bf16.msra.mxu0 0
    %108 = vmatprep.subr.bf16.mxu0 0
    %109 = vmatpush1.bf16.msra.mxu0 0
    %110 = vmatprep.subr.bf16.mxu0 0
    %111 = vmatpush1.bf16.msra.mxu0 0
    %112 = vmatprep.subr.bf16.mxu0 0
    %113 = vmatpush1.bf16.msra.mxu0 0
    %114 = vmatprep.subr.bf16.mxu0 0
    %115 = vmatpush1.bf16.msra.mxu0 0
    %116 = vmatprep.subr.bf16.mxu0 0
    %117 = vmatpush1.bf16.msra.mxu0 0
    %118 = vmatprep.subr.bf16.mxu0 0
    %119 = vmatpush1.bf16.msra.mxu0 0
    %120 = vmatprep.mubr.bf16.mxu0 0
    %121 = vmatmul.mubr.bf16.gmra.mrb[0].mxu0 %v86
    %v122 = vpop.f32.mrb[0].mxu0
    %v123 = vadd.f32 %v53, %v122
    %v124 = vpop.f32.mrb[0].mxu0
    %v125 = vpop.f32.mrb[0].mxu0
    %v126 = vadd.f32 %v53, %v125
    %v127 = vpop.f32.mrb[0].mxu0
    %128 = vdwg.mxu0
    %129 = vst [vmem:[#allocation2] sm:$0xff] %v123
    %130 = vst [vmem:[#allocation2 + $0x8] sm:$0xff] %v126
    %v131 = vld [vmem:[#allocation3] sm:$0x3]
    %v132 = vld [vmem:[#allocation4] sm:$0x3]
    %v133 = vpack.c.bf16 %v131, %v131
    %v134 = vld [vmem:[%s2] sm:$0xf]
    %v135 = vld [vmem:[%s2 + $0x4] sm:$0xf]
    %v136 = vld [vmem:[%s2 + $0x8] sm:$0xf]
    %v137 = vld [vmem:[%s2 + $0xc] sm:$0xf]
    %v142 = vunpack.c.l.b16 %v134
    %v143 = vunpack.c.l.b16 %v135
    %v144 = vunpack.c.l.b16 %v136
    %v145 = vunpack.c.l.b16 %v137
    %v146 = vpack.c.b16 %v143, %v142
    %v147 = vpack.c.b16 %v145, %v144
    %vm150 = vcmask 261120
    %v152 = vsel %vm150, %v133, 0
    %154 = vmatprep.subr.bf16.mxu0 0
    %155 = vmatpush1.bf16.msra.mxu0 %v146
    %156 = vmatprep.subr.bf16.mxu0 0
    %157 = vmatpush1.bf16.msra.mxu0 %v147
    %158 = vmatprep.subr.bf16.mxu0 0
    %159 = vmatpush1.bf16.msra.mxu0 0
    %160 = vmatprep.subr.bf16.mxu0 0
    %161 = vmatpush1.bf16.msra.mxu0 0
    %162 = vmatprep.subr.bf16.mxu0 0
    %163 = vmatpush1.bf16.msra.mxu0 0
    %164 = vmatprep.subr.bf16.mxu0 0
    %165 = vmatpush1.bf16.msra.mxu0 0
    %166 = vmatprep.subr.bf16.mxu0 0
    %167 = vmatpush1.bf16.msra.mxu0 0
    %168 = vmatprep.subr.bf16.mxu0 0
    %169 = vmatpush1.bf16.msra.mxu0 0
    %170 = vmatprep.subr.bf16.mxu0 0
    %171 = vmatpush1.bf16.msra.mxu0 0
    %172 = vmatprep.subr.bf16.mxu0 0
    %173 = vmatpush1.bf16.msra.mxu0 0
    %174 = vmatprep.subr.bf16.mxu0 0
    %175 = vmatpush1.bf16.msra.mxu0 0
    %176 = vmatprep.subr.bf16.mxu0 0
    %177 = vmatpush1.bf16.msra.mxu0 0
    %178 = vmatprep.subr.bf16.mxu0 0
    %179 = vmatpush1.bf16.msra.mxu0 0
    %180 = vmatprep.subr.bf16.mxu0 0
    %181 = vmatpush1.bf16.msra.mxu0 0
    %182 = vmatprep.subr.bf16.mxu0 0
    %183 = vmatpush1.bf16.msra.mxu0 0
    %184 = vmatprep.subr.bf16.mxu0 0
    %185 = vmatpush1.bf16.msra.mxu0 0
    %186 = vmatprep.mubr.bf16.mxu0 0
    %187 = vmatmul.mubr.bf16.gmra.mrb[0].mxu0 %v152
    %v188 = vpop.f32.mrb[0].mxu0
    %v189 = vadd.f32 0.0, %v188
    %v190 = vpop.f32.mrb[0].mxu0
    %v191 = vpop.f32.mrb[0].mxu0
    %v192 = vpop.f32.mrb[0].mxu0
    %193 = vdwg.mxu0
    %v194 = vld [vmem:[#allocation2] sm:$0x3]
    %v195 = vadd.f32 %v194, %v189
    %v196 = vxor.u32 %v195, 2147483648
    %v197 = vmul.f32 %v196, 1.442695
    %v198 = vpow.pop %v197
    %v199 = vadd.f32 %v198, 1.0
    %v200 = vrcp.pop %v199
    %v201 = vmul.f32 1.0, %v200
    %v202 = vtanh.pop %v195
    %204 = vrot.lane.b32.xlu0 %v132, 32
    %v205 = vpop.permute.xlu0 %204
    %v207 = vmul.f32 %v201, %v205
    %209 = vrot.lane.b32.xlu0 %v202, 64
    %v210 = vpop.permute.xlu0 %209
    %v212 = vmul.f32 %v201, %v210
    %214 = vrot.lane.b32.xlu0 %v212, 32
    %v215 = vpop.permute.xlu0 %214
    %v217 = vadd.f32 %v207, %v215
    %v218 = vtanh.pop %v217
    %220 = vrot.lane.b32.xlu0 %v218, 64
    %v221 = vpop.permute.xlu0 %220
    %v223 = vmul.f32 %v201, %v221
    %225 = vrot.lane.b32.xlu0 %v223, 32
    %v226 = vpop.permute.xlu0 %225
    %vm228 = vcmask 254976
    %229 = vst.msk [vmem:[%s6] sm:$0x3] %vm228, %v226
    %v230 = vpack.c.bf16 %v223, %v223
    %v231 = vld [vmem:[%s2] sm:$0xf]
    %v232 = vld [vmem:[%s2 + $0x4] sm:$0xf]
    %v233 = vld [vmem:[%s2 + $0x8] sm:$0xf]
    %v234 = vld [vmem:[%s2 + $0xc] sm:$0xf]
    %236 = vrot.lane.b32.xlu0 %v230, 32
    %v237 = vpop.permute.xlu0 %236
    %v242 = vunpack.c.l.b16 %v231
    %v243 = vunpack.c.l.b16 %v232
    %v244 = vunpack.c.l.b16 %v233
    %v245 = vunpack.c.l.b16 %v234
    %v246 = vpack.c.b16 %v243, %v242
    %v247 = vpack.c.b16 %v245, %v244
    %v251 = vsel %vm150, %v237, 0
    %253 = vmatprep.subr.bf16.mxu0 0
    %254 = vmatpush1.bf16.msra.mxu0 %v246
    %255 = vmatprep.subr.bf16.mxu0 0
    %256 = vmatpush1.bf16.msra.mxu0 %v247
    %257 = vmatprep.subr.bf16.mxu0 0
    %258 = vmatpush1.bf16.msra.mxu0 0
    %259 = vmatprep.subr.bf16.mxu0 0
    %260 = vmatpush1.bf16.msra.mxu0 0
    %261 = vmatprep.subr.bf16.mxu0 0
    %262 = vmatpush1.bf16.msra.mxu0 0
    %263 = vmatprep.subr.bf16.mxu0 0
    %264 = vmatpush1.bf16.msra.mxu0 0
    %265 = vmatprep.subr.bf16.mxu0 0
    %266 = vmatpush1.bf16.msra.mxu0 0
    %267 = vmatprep.subr.bf16.mxu0 0
    %268 = vmatpush1.bf16.msra.mxu0 0
    %269 = vmatprep.subr.bf16.mxu0 0
    %270 = vmatpush1.bf16.msra.mxu0 0
    %271 = vmatprep.subr.bf16.mxu0 0
    %272 = vmatpush1.bf16.msra.mxu0 0
    %273 = vmatprep.subr.bf16.mxu0 0
    %274 = vmatpush1.bf16.msra.mxu0 0
    %275 = vmatprep.subr.bf16.mxu0 0
    %276 = vmatpush1.bf16.msra.mxu0 0
    %277 = vmatprep.subr.bf16.mxu0 0
    %278 = vmatpush1.bf16.msra.mxu0 0
    %279 = vmatprep.subr.bf16.mxu0 0
    %280 = vmatpush1.bf16.msra.mxu0 0
    %281 = vmatprep.subr.bf16.mxu0 0
    %282 = vmatpush1.bf16.msra.mxu0 0
    %283 = vmatprep.subr.bf16.mxu0 0
    %284 = vmatpush1.bf16.msra.mxu0 0
    %285 = vmatprep.mubr.bf16.mxu0 0
    %286 = vmatmul.mubr.bf16.gmra.mrb[0].mxu0 %v251
    %v287 = vpop.f32.mrb[0].mxu0
    %v288 = vadd.f32 0.0, %v287
    %v289 = vpop.f32.mrb[0].mxu0
    %v290 = vpop.f32.mrb[0].mxu0
    %v291 = vpop.f32.mrb[0].mxu0
    %292 = vdwg.mxu0
    %v293 = vld [vmem:[#allocation2 + $0x2] sm:$0x3]
    %v294 = vadd.f32 %v293, %v288
    %v295 = vxor.u32 %v294, 2147483648
    %v296 = vmul.f32 %v295, 1.442695
    %v297 = vpow.pop %v296
    %v298 = vadd.f32 %v297, 1.0
    %v299 = vrcp.pop %v298
    %v300 = vmul.f32 1.0, %v299
    %v301 = vtanh.pop %v294
    %v302 = vmul.f32 %v300, %v217
    %304 = vrot.lane.b32.xlu0 %v301, 64
    %v305 = vpop.permute.xlu0 %304
    %v307 = vmul.f32 %v300, %v305
    %309 = vrot.lane.b32.xlu0 %v307, 32
    %v310 = vpop.permute.xlu0 %309
    %v312 = vadd.f32 %v302, %v310
    %v313 = vtanh.pop %v312
    %315 = vrot.lane.b32.xlu0 %v313, 64
    %v316 = vpop.permute.xlu0 %315
    %v318 = vmul.f32 %v300, %v316
    %320 = vrot.lane.b32.xlu0 %v318, 32
    %v321 = vpop.permute.xlu0 %320
    %s323 = scalar_lea.vmem %s6, 2
    %324 = vst.msk [vmem:[%s323] sm:$0x3] %vm228, %v321
    %v325 = vpack.c.bf16 %v318, %v318
    %v326 = vld [vmem:[%s2] sm:$0xf]
    %v327 = vld [vmem:[%s2 + $0x4] sm:$0xf]
    %v328 = vld [vmem:[%s2 + $0x8] sm:$0xf]
    %v329 = vld [vmem:[%s2 + $0xc] sm:$0xf]
    %331 = vrot.lane.b32.xlu0 %v325, 32
    %v332 = vpop.permute.xlu0 %331
    %v337 = vunpack.c.l.b16 %v326
    %v338 = vunpack.c.l.b16 %v327
    %v339 = vunpack.c.l.b16 %v328
    %v340 = vunpack.c.l.b16 %v329
    %v341 = vpack.c.b16 %v338, %v337
    %v342 = vpack.c.b16 %v340, %v339
    %v346 = vsel %vm150, %v332, 0
    %348 = vmatprep.subr.bf16.mxu0 0
    %349 = vmatpush1.bf16.msra.mxu0 %v341
    %350 = vmatprep.subr.bf16.mxu0 0
    %351 = vmatpush1.bf16.msra.mxu0 %v342
    %352 = vmatprep.subr.bf16.mxu0 0
    %353 = vmatpush1.bf16.msra.mxu0 0
    %354 = vmatprep.subr.bf16.mxu0 0
    %355 = vmatpush1.bf16.msra.mxu0 0
    %356 = vmatprep.subr.bf16.mxu0 0
    %357 = vmatpush1.bf16.msra.mxu0 0
    %358 = vmatprep.subr.bf16.mxu0 0
    %359 = vmatpush1.bf16.msra.mxu0 0
    %360 = vmatprep.subr.bf16.mxu0 0
    %361 = vmatpush1.bf16.msra.mxu0 0
    %362 = vmatprep.subr.bf16.mxu0 0
    %363 = vmatpush1.bf16.msra.mxu0 0
    %364 = vmatprep.subr.bf16.mxu0 0
    %365 = vmatpush1.bf16.msra.mxu0 0
    %366 = vmatprep.subr.bf16.mxu0 0
    %367 = vmatpush1.bf16.msra.mxu0 0
    %368 = vmatprep.subr.bf16.mxu0 0
    %369 = vmatpush1.bf16.msra.mxu0 0
    %370 = vmatprep.subr.bf16.mxu0 0
    %371 = vmatpush1.bf16.msra.mxu0 0
    %372 = vmatprep.subr.bf16.mxu0 0
    %373 = vmatpush1.bf16.msra.mxu0 0
    %374 = vmatprep.subr.bf16.mxu0 0
    %375 = vmatpush1.bf16.msra.mxu0 0
    %376 = vmatprep.subr.bf16.mxu0 0
    %377 = vmatpush1.bf16.msra.mxu0 0
    %378 = vmatprep.subr.bf16.mxu0 0
    %379 = vmatpush1.bf16.msra.mxu0 0
    %380 = vmatprep.mubr.bf16.mxu0 0
    %381 = vmatmul.mubr.bf16.gmra.mrb[0].mxu0 %v346
    %v382 = vpop.f32.mrb[0].mxu0
    %v383 = vadd.f32 0.0, %v382
    %v384 = vpop.f32.mrb[0].mxu0
    %v385 = vpop.f32.mrb[0].mxu0
    %v386 = vpop.f32.mrb[0].mxu0
    %387 = vdwg.mxu0
    %v388 = vld [vmem:[#allocation2 + $0x4] sm:$0x3]
    %v389 = vadd.f32 %v388, %v383
    %v390 = vxor.u32 %v389, 2147483648
    %v391 = vmul.f32 %v390, 1.442695
    %v392 = vpow.pop %v391
    %v393 = vadd.f32 %v392, 1.0
    %v394 = vrcp.pop %v393
    %v395 = vmul.f32 1.0, %v394
    %v396 = vtanh.pop %v389
    %v397 = vmul.f32 %v395, %v312
    %399 = vrot.lane.b32.xlu0 %v396, 64
    %v400 = vpop.permute.xlu0 %399
    %v402 = vmul.f32 %v395, %v400
    %404 = vrot.lane.b32.xlu0 %v402, 32
    %v405 = vpop.permute.xlu0 %404
    %v407 = vadd.f32 %v397, %v405
    %v408 = vtanh.pop %v407
    %410 = vrot.lane.b32.xlu0 %v408, 64
    %v411 = vpop.permute.xlu0 %410
    %v413 = vmul.f32 %v395, %v411
    %415 = vrot.lane.b32.xlu0 %v413, 32
    %v416 = vpop.permute.xlu0 %415
    %s418 = scalar_lea.vmem %s6, 4
    %419 = vst.msk [vmem:[%s418] sm:$0x3] %vm228, %v416
    %v420 = vpack.c.bf16 %v413, %v413
    %v421 = vld [vmem:[%s2] sm:$0xf]
    %v422 = vld [vmem:[%s2 + $0x4] sm:$0xf]
    %v423 = vld [vmem:[%s2 + $0x8] sm:$0xf]
    %v424 = vld [vmem:[%s2 + $0xc] sm:$0xf]
    %426 = vrot.lane.b32.xlu0 %v420, 32
    %v427 = vpop.permute.xlu0 %426
    %v432 = vunpack.c.l.b16 %v421
    %v433 = vunpack.c.l.b16 %v422
    %v434 = vunpack.c.l.b16 %v423
    %v435 = vunpack.c.l.b16 %v424
    %v436 = vpack.c.b16 %v433, %v432
    %v437 = vpack.c.b16 %v435, %v434
    %v441 = vsel %vm150, %v427, 0
    %443 = vmatprep.subr.bf16.mxu0 0
    %444 = vmatpush1.bf16.msra.mxu0 %v436
    %445 = vmatprep.subr.bf16.mxu0 0
    %446 = vmatpush1.bf16.msra.mxu0 %v437
    %447 = vmatprep.subr.bf16.mxu0 0
    %448 = vmatpush1.bf16.msra.mxu0 0
    %449 = vmatprep.subr.bf16.mxu0 0
    %450 = vmatpush1.bf16.msra.mxu0 0
    %451 = vmatprep.subr.bf16.mxu0 0
    %452 = vmatpush1.bf16.msra.mxu0 0
    %453 = vmatprep.subr.bf16.mxu0 0
    %454 = vmatpush1.bf16.msra.mxu0 0
    %455 = vmatprep.subr.bf16.mxu0 0
    %456 = vmatpush1.bf16.msra.mxu0 0
    %457 = vmatprep.subr.bf16.mxu0 0
    %458 = vmatpush1.bf16.msra.mxu0 0
    %459 = vmatprep.subr.bf16.mxu0 0
    %460 = vmatpush1.bf16.msra.mxu0 0
    %461 = vmatprep.subr.bf16.mxu0 0
    %462 = vmatpush1.bf16.msra.mxu0 0
    %463 = vmatprep.subr.bf16.mxu0 0
    %464 = vmatpush1.bf16.msra.mxu0 0
    %465 = vmatprep.subr.bf16.mxu0 0
    %466 = vmatpush1.bf16.msra.mxu0 0
    %467 = vmatprep.subr.bf16.mxu0 0
    %468 = vmatpush1.bf16.msra.mxu0 0
    %469 = vmatprep.subr.bf16.mxu0 0
    %470 = vmatpush1.bf16.msra.mxu0 0
    %471 = vmatprep.subr.bf16.mxu0 0
    %472 = vmatpush1.bf16.msra.mxu0 0
    %473 = vmatprep.subr.bf16.mxu0 0
    %474 = vmatpush1.bf16.msra.mxu0 0
    %475 = vmatprep.mubr.bf16.mxu0 0
    %476 = vmatmul.mubr.bf16.gmra.mrb[0].mxu0 %v441
    %v477 = vpop.f32.mrb[0].mxu0
    %v478 = vadd.f32 0.0, %v477
    %v479 = vpop.f32.mrb[0].mxu0
    %v480 = vpop.f32.mrb[0].mxu0
    %v481 = vpop.f32.mrb[0].mxu0
    %482 = vdwg.mxu0
    %v483 = vld [vmem:[#allocation2 + $0x6] sm:$0x3]
    %v484 = vadd.f32 %v483, %v478
    %v485 = vxor.u32 %v484, 2147483648
    %v486 = vmul.f32 %v485, 1.442695
    %v487 = vpow.pop %v486
    %v488 = vadd.f32 %v487, 1.0
    %v489 = vrcp.pop %v488
    %v490 = vmul.f32 1.0, %v489
    %v491 = vtanh.pop %v484
    %v492 = vmul.f32 %v490, %v407
    %494 = vrot.lane.b32.xlu0 %v491, 64
    %v495 = vpop.permute.xlu0 %494
    %v497 = vmul.f32 %v490, %v495
    %499 = vrot.lane.b32.xlu0 %v497, 32
    %v500 = vpop.permute.xlu0 %499
    %v502 = vadd.f32 %v492, %v500
    %v503 = vtanh.pop %v502
    %505 = vrot.lane.b32.xlu0 %v503, 64
    %v506 = vpop.permute.xlu0 %505
    %v508 = vmul.f32 %v490, %v506
    %510 = vrot.lane.b32.xlu0 %v508, 32
    %v511 = vpop.permute.xlu0 %510
    %s513 = scalar_lea.vmem %s6, 6
    %514 = vst.msk [vmem:[%s513] sm:$0x3] %vm228, %v511
    %v515 = vpack.c.bf16 %v508, %v508
    %v516 = vld [vmem:[%s2] sm:$0xf]
    %v517 = vld [vmem:[%s2 + $0x4] sm:$0xf]
    %v518 = vld [vmem:[%s2 + $0x8] sm:$0xf]
    %v519 = vld [vmem:[%s2 + $0xc] sm:$0xf]
    %521 = vrot.lane.b32.xlu0 %v515, 32
    %v522 = vpop.permute.xlu0 %521
    %v527 = vunpack.c.l.b16 %v516
    %v528 = vunpack.c.l.b16 %v517
    %v529 = vunpack.c.l.b16 %v518
    %v530 = vunpack.c.l.b16 %v519
    %v531 = vpack.c.b16 %v528, %v527
    %v532 = vpack.c.b16 %v530, %v529
    %v536 = vsel %vm150, %v522, 0
    %538 = vmatprep.subr.bf16.mxu0 0
    %539 = vmatpush1.bf16.msra.mxu0 %v531
    %540 = vmatprep.subr.bf16.mxu0 0
    %541 = vmatpush1.bf16.msra.mxu0 %v532
    %542 = vmatprep.subr.bf16.mxu0 0
    %543 = vmatpush1.bf16.msra.mxu0 0
    %544 = vmatprep.subr.bf16.mxu0 0
    %545 = vmatpush1.bf16.msra.mxu0 0
    %546 = vmatprep.subr.bf16.mxu0 0
    %547 = vmatpush1.bf16.msra.mxu0 0
    %548 = vmatprep.subr.bf16.mxu0 0
    %549 = vmatpush1.bf16.msra.mxu0 0
    %550 = vmatprep.subr.bf16.mxu0 0
    %551 = vmatpush1.bf16.msra.mxu0 0
    %552 = vmatprep.subr.bf16.mxu0 0
    %553 = vmatpush1.bf16.msra.mxu0 0
    %554 = vmatprep.subr.bf16.mxu0 0
    %555 = vmatpush1.bf16.msra.mxu0 0
    %556 = vmatprep.subr.bf16.mxu0 0
    %557 = vmatpush1.bf16.msra.mxu0 0
    %558 = vmatprep.subr.bf16.mxu0 0
    %559 = vmatpush1.bf16.msra.mxu0 0
    %560 = vmatprep.subr.bf16.mxu0 0
    %561 = vmatpush1.bf16.msra.mxu0 0
    %562 = vmatprep.subr.bf16.mxu0 0
    %563 = vmatpush1.bf16.msra.mxu0 0
    %564 = vmatprep.subr.bf16.mxu0 0
    %565 = vmatpush1.bf16.msra.mxu0 0
    %566 = vmatprep.subr.bf16.mxu0 0
    %567 = vmatpush1.bf16.msra.mxu0 0
    %568 = vmatprep.subr.bf16.mxu0 0
    %569 = vmatpush1.bf16.msra.mxu0 0
    %570 = vmatprep.mubr.bf16.mxu0 0
    %571 = vmatmul.mubr.bf16.gmra.mrb[0].mxu0 %v536
    %v572 = vpop.f32.mrb[0].mxu0
    %v573 = vadd.f32 0.0, %v572
    %v574 = vpop.f32.mrb[0].mxu0
    %v575 = vpop.f32.mrb[0].mxu0
    %v576 = vpop.f32.mrb[0].mxu0
    %577 = vdwg.mxu0
    %v578 = vld [vmem:[#allocation2 + $0x8] sm:$0x3]
    %v579 = vadd.f32 %v578, %v573
    %v580 = vxor.u32 %v579, 2147483648
    %v581 = vmul.f32 %v580, 1.442695
    %v582 = vpow.pop %v581
    %v583 = vadd.f32 %v582, 1.0
    %v584 = vrcp.pop %v583
    %v585 = vmul.f32 1.0, %v584
    %v586 = vtanh.pop %v579
    %v587 = vmul.f32 %v585, %v502
    %589 = vrot.lane.b32.xlu0 %v586, 64
    %v590 = vpop.permute.xlu0 %589
    %v592 = vmul.f32 %v585, %v590
    %594 = vrot.lane.b32.xlu0 %v592, 32
    %v595 = vpop.permute.xlu0 %594
    %v597 = vadd.f32 %v587, %v595
    %v598 = vtanh.pop %v597
    %600 = vrot.lane.b32.xlu0 %v598, 64
    %v601 = vpop.permute.xlu0 %600
    %v603 = vmul.f32 %v585, %v601
    %605 = vrot.lane.b32.xlu0 %v603, 32
    %v606 = vpop.permute.xlu0 %605
    %s608 = scalar_lea.vmem %s6, 8
    %609 = vst.msk [vmem:[%s608] sm:$0x3] %vm228, %v606
    %v610 = vpack.c.bf16 %v603, %v603
    %v611 = vld [vmem:[%s2] sm:$0xf]
    %v612 = vld [vmem:[%s2 + $0x4] sm:$0xf]
    %v613 = vld [vmem:[%s2 + $0x8] sm:$0xf]
    %v614 = vld [vmem:[%s2 + $0xc] sm:$0xf]
    %616 = vrot.lane.b32.xlu0 %v610, 32
    %v617 = vpop.permute.xlu0 %616
    %v622 = vunpack.c.l.b16 %v611
    %v623 = vunpack.c.l.b16 %v612
    %v624 = vunpack.c.l.b16 %v613
    %v625 = vunpack.c.l.b16 %v614
    %v626 = vpack.c.b16 %v623, %v622
    %v627 = vpack.c.b16 %v625, %v624
    %v631 = vsel %vm150, %v617, 0
    %633 = vmatprep.subr.bf16.mxu0 0
    %634 = vmatpush1.bf16.msra.mxu0 %v626
    %635 = vmatprep.subr.bf16.mxu0 0
    %636 = vmatpush1.bf16.msra.mxu0 %v627
    %637 = vmatprep.subr.bf16.mxu0 0
    %638 = vmatpush1.bf16.msra.mxu0 0
    %639 = vmatprep.subr.bf16.mxu0 0
    %640 = vmatpush1.bf16.msra.mxu0 0
    %641 = vmatprep.subr.bf16.mxu0 0
    %642 = vmatpush1.bf16.msra.mxu0 0
    %643 = vmatprep.subr.bf16.mxu0 0
    %644 = vmatpush1.bf16.msra.mxu0 0
    %645 = vmatprep.subr.bf16.mxu0 0
    %646 = vmatpush1.bf16.msra.mxu0 0
    %647 = vmatprep.subr.bf16.mxu0 0
    %648 = vmatpush1.bf16.msra.mxu0 0
    %649 = vmatprep.subr.bf16.mxu0 0
    %650 = vmatpush1.bf16.msra.mxu0 0
    %651 = vmatprep.subr.bf16.mxu0 0
    %652 = vmatpush1.bf16.msra.mxu0 0
    %653 = vmatprep.subr.bf16.mxu0 0
    %654 = vmatpush1.bf16.msra.mxu0 0
    %655 = vmatprep.subr.bf16.mxu0 0
    %656 = vmatpush1.bf16.msra.mxu0 0
    %657 = vmatprep.subr.bf16.mxu0 0
    %658 = vmatpush1.bf16.msra.mxu0 0
    %659 = vmatprep.subr.bf16.mxu0 0
    %660 = vmatpush1.bf16.msra.mxu0 0
    %661 = vmatprep.subr.bf16.mxu0 0
    %662 = vmatpush1.bf16.msra.mxu0 0
    %663 = vmatprep.subr.bf16.mxu0 0
    %664 = vmatpush1.bf16.msra.mxu0 0
    %665 = vmatprep.mubr.bf16.mxu0 0
    %666 = vmatmul.mubr.bf16.gmra.mrb[0].mxu0 %v631
    %v667 = vpop.f32.mrb[0].mxu0
    %v668 = vadd.f32 0.0, %v667
    %v669 = vpop.f32.mrb[0].mxu0
    %v670 = vpop.f32.mrb[0].mxu0
    %v671 = vpop.f32.mrb[0].mxu0
    %672 = vdwg.mxu0
    %v673 = vld [vmem:[#allocation2 + $0xa] sm:$0x3]
    %v674 = vadd.f32 %v673, %v668
    %v675 = vxor.u32 %v674, 2147483648
    %v676 = vmul.f32 %v675, 1.442695
    %v677 = vpow.pop %v676
    %v678 = vadd.f32 %v677, 1.0
    %v679 = vrcp.pop %v678
    %v680 = vmul.f32 1.0, %v679
    %v681 = vtanh.pop %v674
    %v682 = vmul.f32 %v680, %v597
    %684 = vrot.lane.b32.xlu0 %v681, 64
    %v685 = vpop.permute.xlu0 %684
    %v687 = vmul.f32 %v680, %v685
    %689 = vrot.lane.b32.xlu0 %v687, 32
    %v690 = vpop.permute.xlu0 %689
    %v692 = vadd.f32 %v682, %v690
    %v693 = vtanh.pop %v692
    %695 = vrot.lane.b32.xlu0 %v693, 64
    %v696 = vpop.permute.xlu0 %695
    %v698 = vmul.f32 %v680, %v696
    %700 = vrot.lane.b32.xlu0 %v698, 32
    %v701 = vpop.permute.xlu0 %700
    %s703 = scalar_lea.vmem %s6, 10
    %704 = vst.msk [vmem:[%s703] sm:$0x3] %vm228, %v701
    %v705 = vpack.c.bf16 %v698, %v698
    %v706 = vld [vmem:[%s2] sm:$0xf]
    %v707 = vld [vmem:[%s2 + $0x4] sm:$0xf]
    %v708 = vld [vmem:[%s2 + $0x8] sm:$0xf]
    %v709 = vld [vmem:[%s2 + $0xc] sm:$0xf]
    %711 = vrot.lane.b32.xlu0 %v705, 32
    %v712 = vpop.permute.xlu0 %711
    %v717 = vunpack.c.l.b16 %v706
    %v718 = vunpack.c.l.b16 %v707
    %v719 = vunpack.c.l.b16 %v708
    %v720 = vunpack.c.l.b16 %v709
    %v721 = vpack.c.b16 %v718, %v717
    %v722 = vpack.c.b16 %v720, %v719
    %v726 = vsel %vm150, %v712, 0
    %728 = vmatprep.subr.bf16.mxu0 0
    %729 = vmatpush1.bf16.msra.mxu0 %v721
    %730 = vmatprep.subr.bf16.mxu0 0
    %731 = vmatpush1.bf16.msra.mxu0 %v722
    %732 = vmatprep.subr.bf16.mxu0 0
    %733 = vmatpush1.bf16.msra.mxu0 0
    %734 = vmatprep.subr.bf16.mxu0 0
    %735 = vmatpush1.bf16.msra.mxu0 0
    %736 = vmatprep.subr.bf16.mxu0 0
    %737 = vmatpush1.bf16.msra.mxu0 0
    %738 = vmatprep.subr.bf16.mxu0 0
    %739 = vmatpush1.bf16.msra.mxu0 0
    %740 = vmatprep.subr.bf16.mxu0 0
    %741 = vmatpush1.bf16.msra.mxu0 0
    %742 = vmatprep.subr.bf16.mxu0 0
    %743 = vmatpush1.bf16.msra.mxu0 0
    %744 = vmatprep.subr.bf16.mxu0 0
    %745 = vmatpush1.bf16.msra.mxu0 0
    %746 = vmatprep.subr.bf16.mxu0 0
    %747 = vmatpush1.bf16.msra.mxu0 0
    %748 = vmatprep.subr.bf16.mxu0 0
    %749 = vmatpush1.bf16.msra.mxu0 0
    %750 = vmatprep.subr.bf16.mxu0 0
    %751 = vmatpush1.bf16.msra.mxu0 0
    %752 = vmatprep.subr.bf16.mxu0 0
    %753 = vmatpush1.bf16.msra.mxu0 0
    %754 = vmatprep.subr.bf16.mxu0 0
    %755 = vmatpush1.bf16.msra.mxu0 0
    %756 = vmatprep.subr.bf16.mxu0 0
    %757 = vmatpush1.bf16.msra.mxu0 0
    %758 = vmatprep.subr.bf16.mxu0 0
    %759 = vmatpush1.bf16.msra.mxu0 0
    %760 = vmatprep.mubr.bf16.mxu0 0
    %761 = vmatmul.mubr.bf16.gmra.mrb[0].mxu0 %v726
    %v762 = vpop.f32.mrb[0].mxu0
    %v763 = vadd.f32 0.0, %v762
    %v764 = vpop.f32.mrb[0].mxu0
    %v765 = vpop.f32.mrb[0].mxu0
    %v766 = vpop.f32.mrb[0].mxu0
    %767 = vdwg.mxu0
    %v768 = vld [vmem:[#allocation2 + $0xc] sm:$0x3]
    %v769 = vadd.f32 %v768, %v763
    %v770 = vxor.u32 %v769, 2147483648
    %v771 = vmul.f32 %v770, 1.442695
    %v772 = vpow.pop %v771
    %v773 = vadd.f32 %v772, 1.0
    %v774 = vrcp.pop %v773
    %v775 = vmul.f32 1.0, %v774
    %v776 = vtanh.pop %v769
    %v777 = vmul.f32 %v775, %v692
    %779 = vrot.lane.b32.xlu0 %v776, 64
    %v780 = vpop.permute.xlu0 %779
    %v782 = vmul.f32 %v775, %v780
    %784 = vrot.lane.b32.xlu0 %v782, 32
    %v785 = vpop.permute.xlu0 %784
    %v787 = vadd.f32 %v777, %v785
    %v788 = vtanh.pop %v787
    %790 = vrot.lane.b32.xlu0 %v788, 64
    %v791 = vpop.permute.xlu0 %790
    %v793 = vmul.f32 %v775, %v791
    %795 = vrot.lane.b32.xlu0 %v793, 32
    %v796 = vpop.permute.xlu0 %795
    %s798 = scalar_lea.vmem %s6, 12
    %799 = vst.msk [vmem:[%s798] sm:$0x3] %vm228, %v796
    %v800 = vpack.c.bf16 %v793, %v793
    %v801 = vld [vmem:[%s2] sm:$0xf]
    %v802 = vld [vmem:[%s2 + $0x4] sm:$0xf]
    %v803 = vld [vmem:[%s2 + $0x8] sm:$0xf]
    %v804 = vld [vmem:[%s2 + $0xc] sm:$0xf]
    %806 = vrot.lane.b32.xlu0 %v800, 32
    %v807 = vpop.permute.xlu0 %806
    %v812 = vunpack.c.l.b16 %v801
    %v813 = vunpack.c.l.b16 %v802
    %v814 = vunpack.c.l.b16 %v803
    %v815 = vunpack.c.l.b16 %v804
    %v816 = vpack.c.b16 %v813, %v812
    %v817 = vpack.c.b16 %v815, %v814
    %v821 = vsel %vm150, %v807, 0
    %823 = vmatprep.subr.bf16.mxu0 0
    %824 = vmatpush1.bf16.msra.mxu0 %v816
    %825 = vmatprep.subr.bf16.mxu0 0
    %826 = vmatpush1.bf16.msra.mxu0 %v817
    %827 = vmatprep.subr.bf16.mxu0 0
    %828 = vmatpush1.bf16.msra.mxu0 0
    %829 = vmatprep.subr.bf16.mxu0 0
    %830 = vmatpush1.bf16.msra.mxu0 0
    %831 = vmatprep.subr.bf16.mxu0 0
    %832 = vmatpush1.bf16.msra.mxu0 0
    %833 = vmatprep.subr.bf16.mxu0 0
    %834 = vmatpush1.bf16.msra.mxu0 0
    %835 = vmatprep.subr.bf16.mxu0 0
    %836 = vmatpush1.bf16.msra.mxu0 0
    %837 = vmatprep.subr.bf16.mxu0 0
    %838 = vmatpush1.bf16.msra.mxu0 0
    %839 = vmatprep.subr.bf16.mxu0 0
    %840 = vmatpush1.bf16.msra.mxu0 0
    %841 = vmatprep.subr.bf16.mxu0 0
    %842 = vmatpush1.bf16.msra.mxu0 0
    %843 = vmatprep.subr.bf16.mxu0 0
    %844 = vmatpush1.bf16.msra.mxu0 0
    %845 = vmatprep.subr.bf16.mxu0 0
    %846 = vmatpush1.bf16.msra.mxu0 0
    %847 = vmatprep.subr.bf16.mxu0 0
    %848 = vmatpush1.bf16.msra.mxu0 0
    %849 = vmatprep.subr.bf16.mxu0 0
    %850 = vmatpush1.bf16.msra.mxu0 0
    %851 = vmatprep.subr.bf16.mxu0 0
    %852 = vmatpush1.bf16.msra.mxu0 0
    %853 = vmatprep.subr.bf16.mxu0 0
    %854 = vmatpush1.bf16.msra.mxu0 0
    %855 = vmatprep.mubr.bf16.mxu0 0
    %856 = vmatmul.mubr.bf16.gmra.mrb[0].mxu0 %v821
    %v857 = vpop.f32.mrb[0].mxu0
    %v858 = vadd.f32 0.0, %v857
    %v859 = vpop.f32.mrb[0].mxu0
    %v860 = vpop.f32.mrb[0].mxu0
    %v861 = vpop.f32.mrb[0].mxu0
    %862 = vdwg.mxu0
    %v863 = vld [vmem:[#allocation2 + $0xe] sm:$0x3]
    %v864 = vadd.f32 %v863, %v858
    %v865 = vxor.u32 %v864, 2147483648
    %v866 = vmul.f32 %v865, 1.442695
    %v867 = vpow.pop %v866
    %v868 = vadd.f32 %v867, 1.0
    %v869 = vrcp.pop %v868
    %v870 = vmul.f32 1.0, %v869
    %v871 = vtanh.pop %v864
    %v872 = vmul.f32 %v870, %v787
    %874 = vrot.lane.b32.xlu0 %v871, 64
    %v875 = vpop.permute.xlu0 %874
    %v877 = vmul.f32 %v870, %v875
    %879 = vrot.lane.b32.xlu0 %v877, 32
    %v880 = vpop.permute.xlu0 %879
    %v882 = vadd.f32 %v872, %v880
    %v883 = vtanh.pop %v882
    %885 = vrot.lane.b32.xlu0 %v883, 64
    %v886 = vpop.permute.xlu0 %885
    %v888 = vmul.f32 %v870, %v886
    %890 = vrot.lane.b32.xlu0 %v888, 32
    %v891 = vpop.permute.xlu0 %890
    %s893 = scalar_lea.vmem %s6, 14
    %894 = vst.msk [vmem:[%s893] sm:$0x3] %vm228, %v891
    %895 = vst.msk [vmem:[#allocation3] sm:$0x3] %vm228, %v891
    %897 = vrot.lane.b32.xlu0 %v882, 96
    %v898 = vpop.permute.xlu0 %897
    %900 = vst.msk [vmem:[#allocation4] sm:$0x3] %vm228, %v898
    // Predicated region
    $region30: #{decoder_attn_forward.1} parent=1 // pred_check
      %p901 = pneg %p29
    $region31: #{decoder_attn_forward.1} parent=1 // pred_check_branch
      %903 = sbr.rel (%p901) target = $region33
    $region32: #{decoder_attn_forward.1} parent=1 // pred_region
      %904 = vst.msk [vmem:[#allocation5] sm:$0x3] %vm228, %v891
      %905 = vst.msk [vmem:[#allocation7] sm:$0x3] %vm228, %v898
    $region33: #{decoder_attn_forward.1} parent=1 // pred_fallthru
      _
    // Predicated region
    $region34: #{decoder_attn_forward.1} parent=1 // pred_check
      _
    $region35: #{decoder_attn_forward.1} parent=1 // pred_check_branch
      %907 = sbr.rel (0) target = $region37
    $region36: #{decoder_attn_forward.1} parent=1 // pred_region
      _
    $region37: #{decoder_attn_forward.1} parent=1 // pred_fallthru
      _
    // Predicated region
    $region38: #{decoder_attn_forward.1} parent=1 // pred_check
      _
    $region39: #{decoder_attn_forward.1} parent=1 // pred_check_branch
      %909 = sbr.rel (0) target = $region41
    $region40: #{decoder_attn_forward.1} parent=1 // pred_region
      %s911 = ssub.s32 32, 32
      %912 = vsyncadd [#allocation6], %s911
      %s914 = sshll.u32 [#allocation5], 4
      %s915 = int_to_ptr.vmem [resolvable:$true] %s914
      %917 = dma.vmem_to_hbm [thread:$0]  %s915, 32, %s7, [#allocation6]
    $region41: #{decoder_attn_forward.1} parent=1 // pred_fallthru
      _
    // Predicated region
    $region42: #{decoder_attn_forward.1} parent=1 // pred_check
      _
    $region43: #{decoder_attn_forward.1} parent=1 // pred_check_branch
      %919 = sbr.rel (0) target = $region45
    $region44: #{decoder_attn_forward.1} parent=1 // pred_region
      %s921 = ssub.s32 32, 32
      %922 = vsyncadd [#allocation8], %s921
      %s924 = sshll.u32 [#allocation7], 4
      %s925 = int_to_ptr.vmem [resolvable:$true] %s924
      %927 = dma.vmem_to_hbm [thread:$0]  %s925, 32, %s8, [#allocation8]
    $region45: #{decoder_attn_forward.1} parent=1 // pred_fallthru
      _
    // Predicated region
    $region46: #{decoder_attn_forward.1} parent=1 // pred_check
      _
    $region47: #{decoder_attn_forward.1} parent=1 // pred_check_branch
      %929 = sbr.rel (0) target = $region49
    $region48: #{decoder_attn_forward.1} parent=1 // pred_region
      _
    $region49: #{decoder_attn_forward.1} parent=1 // pred_fallthru
      _
    // Predicated region
    $region50: #{decoder_attn_forward.1} parent=1 // pred_check
      _
    $region51: #{decoder_attn_forward.1} parent=1 // pred_check_branch
      %931 = sbr.rel (0) target = $region53
    $region52: #{decoder_attn_forward.1} parent=1 // pred_region
      %932 = dma.done [#allocation6], 32
    $region53: #{decoder_attn_forward.1} parent=1 // pred_fallthru
      _
    // Predicated region
    $region54: #{decoder_attn_forward.1} parent=1 // pred_check
      _
    $region55: #{decoder_attn_forward.1} parent=1 // pred_check_branch
      %934 = sbr.rel (0) target = $region57
    $region56: #{decoder_attn_forward.1} parent=1 // pred_region
      %935 = dma.done [#allocation8], 32
    $region57: #{decoder_attn_forward.1} parent=1 // pred_fallthru
      _
    %936 = vsyncpa [#allocation6], 1
    %937 = vsyncpa [#allocation8], 1

</llo_original>
